<compile_context>
chip_gen: v6e
topology: v6e:2x2x1
jax: 0.10.0
libtpu: 0.0.40
codegen_flags: <defaults>
</compile_context>

<pallas_src>
import functools

import jax
import jax.numpy as jnp
from jax import lax
from jax.experimental import pallas as pl
from jax.experimental.pallas import tpu as pltpu


def _round_up(n: int, m: int) -> int:
    return ((n + m - 1) // m) * m


def _mlp_kernel(x_ref, w1_ref, b1_ref, w2_ref, b2_ref, w3_ref, b3_ref, o_ref,
                *, precision):
    # One (tb, n_obs) batch tile: 3 MXU matmuls with f32 accumulation + fused
    # bias adds / ReLUs on the VPU.  Weights/biases are VMEM-resident (constant
    # index maps), x is cast to the compute dtype in-kernel (free VPU filler
    # under the DMA bottleneck).
    compute_dtype = w1_ref.dtype
    x = x_ref[...].astype(compute_dtype)
    h1 = jnp.dot(x, w1_ref[...], preferred_element_type=jnp.float32,
                 precision=precision) + b1_ref[...]
    h1 = jnp.maximum(h1, 0.0).astype(compute_dtype)
    h2 = jnp.dot(h1, w2_ref[...], preferred_element_type=jnp.float32,
                 precision=precision) + b2_ref[...]
    h2 = jnp.maximum(h2, 0.0).astype(compute_dtype)
    out = jnp.dot(h2, w3_ref[...], preferred_element_type=jnp.float32,
                  precision=precision) + b3_ref[...]
    o_ref[...] = out.astype(o_ref.dtype)


def prepare_params(torch_params, compute_dtype=jnp.bfloat16):
    """Convert torch-layout params ONCE, outside the per-step forward call.

    torch_params: dict with w1/w2/w3 of shape (out_features, in_features) and
    b1/b2/b3 of shape (out_features,) — the nn.Linear layout.
    Returns weights as (in, out) in `compute_dtype`, biases as f32 (1, out).
    """
    out = {}
    for k in ("w1", "w2", "w3"):
        out[k] = jnp.asarray(torch_params[k], jnp.float32).T.astype(compute_dtype)
    for k in ("b1", "b2", "b3"):
        out[k] = jnp.asarray(torch_params[k], jnp.float32).reshape(1, -1)
    return out


@functools.partial(jax.jit, static_argnames=("tb",))
def policy_network_forward(x, params, *, tb=None):
    """x: (B, n_obs). params: output of prepare_params(). Returns (B, n_act) f32."""
    w1, b1, w2, b2, w3, b3 = (params[k] for k in ("w1", "b1", "w2", "b2", "w3", "b3"))
    B, n_obs = x.shape
    n_hidden = w1.shape[1]
    n_act = w3.shape[1]

    compute_dtype = w1.dtype
    # Bit-faithful f32 path needs HIGHEST precision (default f32 matmul may use a
    # bf16-pass decomposition on TPU); bf16 path uses the native MXU rate.
    precision = lax.Precision.HIGHEST if w1.dtype == jnp.float32 else None

    # --- Batch tile selection: big tiles (<=1024 rows) to amortize the ~0.35us
    # per-grid-step overhead; >=2 tiles when B > 1024 so both v7x TCs get work.
    if tb is None:
        b8 = _round_up(B, 8)
        if b8 <= 1024:
            tb = b8
        else:
            n_tiles = -(-b8 // 1024)
            tb = _round_up(-(-b8 // n_tiles), 8)
    b_p = _round_up(B, tb)
    grid = (b_p // tb,)

    # Row-pad x only (no lane padding, no pre-cast: cast happens in-kernel).
    x = x.astype(jnp.float32)
    if b_p != B:
        x = jnp.pad(x, ((0, b_p - B), (0, 0)))

    # --- Resident weights: constant index maps.  For very large hidden sizes,
    # single-buffer them (double-buffering a constant block is pure VMEM waste).
    single_buffer_weights = n_hidden >= 2048
    def wspec(shape):
        if single_buffer_weights:
            return pl.BlockSpec(shape, lambda i: (0, 0), pipeline_mode=pl.Buffered(1))
        return pl.BlockSpec(shape, lambda i: (0, 0))

    # --- Cost estimate from TRUE (unpadded) dims.
    flops = 2 * B * (n_obs * n_hidden + n_hidden * n_hidden + n_hidden * n_act)
    w_item = jnp.dtype(compute_dtype).itemsize
    weight_bytes = (n_obs * n_hidden + n_hidden * n_hidden + n_hidden * n_act) * w_item
    bias_bytes = (2 * n_hidden + n_act) * 4
    bytes_accessed = B * n_obs * 4 + weight_bytes + bias_bytes + B * n_act * 4
    cost = pl.CostEstimate(flops=flops, transcendentals=0,
                           bytes_accessed=bytes_accessed)

    # --- VMEM budget: raise the scoped limit only when the estimate is large
    # (v5e default 16 MiB scoped, v7x 32 MiB scoped / 64 MiB physical).
    w_bufs = 1 if single_buffer_weights else 2
    vmem_est = (2 * tb * n_obs * 4                      # x tile, double-buffered
                + 2 * tb * n_act * 4                    # out tile, double-buffered
                + w_bufs * (weight_bytes + bias_bytes)  # resident weights/biases
                + 3 * tb * max(n_hidden, n_act) * 4)    # f32 intermediates
    compiler_kwargs = dict(dimension_semantics=("parallel",))
    if vmem_est > (8 << 20):
        compiler_kwargs["vmem_limit_bytes"] = int(
            min(60 << 20, max(32 << 20, vmem_est * 3 // 2)))

    out = pl.pallas_call(
        functools.partial(_mlp_kernel, precision=precision),
        out_shape=jax.ShapeDtypeStruct((b_p, n_act), jnp.float32),
        grid=grid,
        in_specs=[
            pl.BlockSpec((tb, n_obs), lambda i: (i, 0)),   # x: tiled over batch only
            wspec((n_obs, n_hidden)),                      # w1 (resident)
            wspec((1, n_hidden)),                          # b1
            wspec((n_hidden, n_hidden)),                   # w2
            wspec((1, n_hidden)),                          # b2
            wspec((n_hidden, n_act)),                      # w3
            wspec((1, n_act)),                             # b3
        ],
        out_specs=pl.BlockSpec((tb, n_act), lambda i: (i, 0)),
        compiler_params=pltpu.CompilerParams(**compiler_kwargs),
        cost_estimate=cost,
    )(x, w1, b1, w2, b2, w3, b3)

    return out[:B] if b_p != B else out


def init_params(key, n_obs, n_act, n_hidden):
    """Deterministic init in torch nn.Linear layout: W (out, in), b (out,)."""
    ks = jax.random.split(key, 6)

    def lin(kw, kb, fan_in, fan_out):
        bound = 1.0 / jnp.sqrt(jnp.float32(fan_in))
        w = jax.random.uniform(kw, (fan_out, fan_in), jnp.float32, -bound, bound)
        b = jax.random.uniform(kb, (fan_out,), jnp.float32, -bound, bound)
        return w, b

    w1, b1 = lin(ks[0], ks[1], n_obs, n_hidden)
    w2, b2 = lin(ks[2], ks[3], n_hidden, n_hidden)
    w3, b3 = lin(ks[4], ks[5], n_hidden, n_act)
    return {"w1": w1, "b1": b1, "w2": w2, "b2": b2, "w3": w3, "b3": b3}


def _reference(x, tp):
    h1 = jnp.maximum(x @ tp["w1"].T + tp["b1"], 0.0)
    h2 = jnp.maximum(h1 @ tp["w2"].T + tp["b2"], 0.0)
    return h2 @ tp["w3"].T + tp["b3"]


if __name__ == "__main__":
    n_obs, n_act, n_hidden = 16, 4, 32
    batch = 8

    key = jax.random.PRNGKey(0)
    k_params, k_x = jax.random.split(key)
    torch_params = init_params(k_params, n_obs, n_act, n_hidden)
    x = jax.random.normal(k_x, (batch, n_obs), jnp.float32)

    ref = _reference(x, torch_params)

    # Exact (f32, HIGHEST precision) compute path: tight tolerance.
    p_f32 = prepare_params(torch_params, compute_dtype=jnp.float32)
    out_f32 = jax.block_until_ready(policy_network_forward(x, p_f32))
    assert out_f32.shape == (batch, n_act), out_f32.shape
    assert jnp.allclose(out_f32, ref, atol=1e-4, rtol=1e-4), float(
        jnp.max(jnp.abs(out_f32 - ref)))

    # Default fast path: bf16 matmul inputs, f32 accumulation.
    p_bf16 = prepare_params(torch_params)
    out_bf16 = jax.block_until_ready(policy_network_forward(x, p_bf16))
    assert out_bf16.shape == (batch, n_act), out_bf16.shape
    assert jnp.allclose(out_bf16, ref, atol=5e-2, rtol=5e-2), float(
        jnp.max(jnp.abs(out_bf16 - ref)))

    print("KERNEL_OK")
</pallas_src>

<mosaic_0001>
module attributes {stable_mosaic.version = 11 : i64} {
  func.func @_mlp_kernel(%arg0: i32, %arg1: memref<8x16xf32, #tpu.memory_space<vmem>>, %arg2: memref<16x32xf32, #tpu.memory_space<vmem>>, %arg3: memref<1x32xf32, #tpu.memory_space<vmem>>, %arg4: memref<32x32xf32, #tpu.memory_space<vmem>>, %arg5: memref<1x32xf32, #tpu.memory_space<vmem>>, %arg6: memref<32x4xf32, #tpu.memory_space<vmem>>, %arg7: memref<1x4xf32, #tpu.memory_space<vmem>>, %arg8: memref<8x4xf32, #tpu.memory_space<vmem>>) attributes {dimension_semantics = [#tpu.dimension_semantics<parallel>], iteration_bounds = array<i64: 1>, scalar_prefetch = 0 : i64, scratch_operands = 0 : i64, tpu.core_type = #tpu.core_type<tc>, window_params = [{transform_indices = @transform_0, window_bounds = array<i64: 8, 16>}, {pipeline_mode = #tpu.pipeline_mode<synchronous>, transform_indices = @transform_1, window_bounds = array<i64: 16, 32>}, {pipeline_mode = #tpu.pipeline_mode<synchronous>, transform_indices = @transform_2, window_bounds = array<i64: 1, 32>}, {pipeline_mode = #tpu.pipeline_mode<synchronous>, transform_indices = @transform_3, window_bounds = array<i64: 32, 32>}, {pipeline_mode = #tpu.pipeline_mode<synchronous>, transform_indices = @transform_4, window_bounds = array<i64: 1, 32>}, {pipeline_mode = #tpu.pipeline_mode<synchronous>, transform_indices = @transform_5, window_bounds = array<i64: 32, 4>}, {pipeline_mode = #tpu.pipeline_mode<synchronous>, transform_indices = @transform_6, window_bounds = array<i64: 1, 4>}, {transform_indices = @transform_7, window_bounds = array<i64: 8, 4>}]} {
    %c0 = arith.constant 0 : index
    %c0_0 = arith.constant 0 : index
    %0 = vector.load %arg1[%c0, %c0_0] : memref<8x16xf32, #tpu.memory_space<vmem>>, vector<8x16xf32>
    %c0_1 = arith.constant 0 : index
    %c0_2 = arith.constant 0 : index
    %1 = vector.load %arg2[%c0_1, %c0_2] : memref<16x32xf32, #tpu.memory_space<vmem>>, vector<16x32xf32>
    %cst = arith.constant dense<0.000000e+00> : vector<8x32xf32>
    %2 = tpu.matmul %0, %1, %cst {dimension_numbers = #tpu.dot_dimension_numbers<[1], [0], [0], [1], [0, 0, 1, 1], [], []>, precision = #tpu.contract_precision<fp32>} : vector<8x16xf32>, vector<16x32xf32>, vector<8x32xf32> -> vector<8x32xf32>
    %c0_3 = arith.constant 0 : index
    %c0_4 = arith.constant 0 : index
    %3 = vector.load %arg3[%c0_3, %c0_4] : memref<1x32xf32, #tpu.memory_space<vmem>>, vector<1x32xf32>
    %4 = vector.broadcast %3 : vector<1x32xf32> to vector<8x32xf32>
    %5 = arith.addf %2, %4 : vector<8x32xf32>
    %cst_5 = arith.constant 0.000000e+00 : f32
    %6 = vector.broadcast %cst_5 : f32 to vector<8x32xf32>
    %7 = arith.maximumf %5, %6 : vector<8x32xf32>
    %c0_6 = arith.constant 0 : index
    %c0_7 = arith.constant 0 : index
    %8 = vector.load %arg4[%c0_6, %c0_7] : memref<32x32xf32, #tpu.memory_space<vmem>>, vector<32x32xf32>
    %cst_8 = arith.constant dense<0.000000e+00> : vector<8x32xf32>
    %9 = tpu.matmul %7, %8, %cst_8 {dimension_numbers = #tpu.dot_dimension_numbers<[1], [0], [0], [1], [0, 0, 1, 1], [], []>, precision = #tpu.contract_precision<fp32>} : vector<8x32xf32>, vector<32x32xf32>, vector<8x32xf32> -> vector<8x32xf32>
    %c0_9 = arith.constant 0 : index
    %c0_10 = arith.constant 0 : index
    %10 = vector.load %arg5[%c0_9, %c0_10] : memref<1x32xf32, #tpu.memory_space<vmem>>, vector<1x32xf32>
    %11 = vector.broadcast %10 : vector<1x32xf32> to vector<8x32xf32>
    %12 = arith.addf %9, %11 : vector<8x32xf32>
    %cst_11 = arith.constant 0.000000e+00 : f32
    %13 = vector.broadcast %cst_11 : f32 to vector<8x32xf32>
    %14 = arith.maximumf %12, %13 : vector<8x32xf32>
    %c0_12 = arith.constant 0 : index
    %c0_13 = arith.constant 0 : index
    %15 = vector.load %arg6[%c0_12, %c0_13] : memref<32x4xf32, #tpu.memory_space<vmem>>, vector<32x4xf32>
    %cst_14 = arith.constant dense<0.000000e+00> : vector<8x4xf32>
    %16 = tpu.matmul %14, %15, %cst_14 {dimension_numbers = #tpu.dot_dimension_numbers<[1], [0], [0], [1], [0, 0, 1, 1], [], []>, precision = #tpu.contract_precision<fp32>} : vector<8x32xf32>, vector<32x4xf32>, vector<8x4xf32> -> vector<8x4xf32>
    %c0_15 = arith.constant 0 : index
    %c0_16 = arith.constant 0 : index
    %17 = vector.load %arg7[%c0_15, %c0_16] : memref<1x4xf32, #tpu.memory_space<vmem>>, vector<1x4xf32>
    %18 = vector.broadcast %17 : vector<1x4xf32> to vector<8x4xf32>
    %19 = arith.addf %16, %18 : vector<8x4xf32>
    %c0_17 = arith.constant 0 : index
    %c0_18 = arith.constant 0 : index
    %20 = vector.load %arg8[%c0_17, %c0_18] : memref<8x4xf32, #tpu.memory_space<vmem>>, vector<8x4xf32>
    tpu.vector_store %arg8[%c0_17, %c0_18], %19 {strides = array<i32>} : memref<8x4xf32, #tpu.memory_space<vmem>>, vector<8x4xf32>,
    return
  }
  func.func @transform_0(%arg0: i32) -> (i32, i32) {
    %c0_i32 = arith.constant 0 : i32
    %c0_i32_0 = arith.constant 0 : i32
    return %arg0, %c0_i32 : i32, i32
  }
  func.func @transform_1(%arg0: i32) -> (i32, i32) {
    %c0_i32 = arith.constant 0 : i32
    %c0_i32_0 = arith.constant 0 : i32
    %c0_i32_1 = arith.constant 0 : i32
    return %c0_i32, %c0_i32_0 : i32, i32
  }
  func.func @transform_2(%arg0: i32) -> (i32, i32) {
    %c0_i32 = arith.constant 0 : i32
    %c0_i32_0 = arith.constant 0 : i32
    %c0_i32_1 = arith.constant 0 : i32
    return %c0_i32, %c0_i32_0 : i32, i32
  }
  func.func @transform_3(%arg0: i32) -> (i32, i32) {
    %c0_i32 = arith.constant 0 : i32
    %c0_i32_0 = arith.constant 0 : i32
    %c0_i32_1 = arith.constant 0 : i32
    return %c0_i32, %c0_i32_0 : i32, i32
  }
  func.func @transform_4(%arg0: i32) -> (i32, i32) {
    %c0_i32 = arith.constant 0 : i32
    %c0_i32_0 = arith.constant 0 : i32
    %c0_i32_1 = arith.constant 0 : i32
    return %c0_i32, %c0_i32_0 : i32, i32
  }
  func.func @transform_5(%arg0: i32) -> (i32, i32) {
    %c0_i32 = arith.constant 0 : i32
    %c0_i32_0 = arith.constant 0 : i32
    %c0_i32_1 = arith.constant 0 : i32
    return %c0_i32, %c0_i32_0 : i32, i32
  }
  func.func @transform_6(%arg0: i32) -> (i32, i32) {
    %c0_i32 = arith.constant 0 : i32
    %c0_i32_0 = arith.constant 0 : i32
    %c0_i32_1 = arith.constant 0 : i32
    return %c0_i32, %c0_i32_0 : i32, i32
  }
  func.func @transform_7(%arg0: i32) -> (i32, i32) {
    %c0_i32 = arith.constant 0 : i32
    %c0_i32_0 = arith.constant 0 : i32
    return %arg0, %c0_i32 : i32, i32
  }
}

</mosaic_0001>

<llo_original>
// kernel: policy_network_forward.1
$region0: #{policy_network_forward.1}
  #allocation0 [shape = 'u32[]', space=smem, size = 0x4, offset = 0x4, fixed_abs, tag = 'smem constant byte address 0x4 - core index']
  #allocation1 [shape = 'u32[144,128]{1,0:T(1,128)}', space=vmem, size = 0x12000, scoped, tag = 'internal scratch']
  %s0 = inlined_call_operand.vmem [shape: f32[8,16], index: 0, kind: input, shape index: {}]
  %s1 = inlined_call_operand.hbm [shape: f32[16,32], index: 1, kind: input, shape index: {}]
  %s2 = inlined_call_operand.vmem [shape: f32[1,32], index: 2, kind: input, shape index: {}]
  %s3 = inlined_call_operand.vmem [shape: f32[32,32], index: 3, kind: input, shape index: {}]
  %s4 = inlined_call_operand.vmem [shape: f32[1,32], index: 4, kind: input, shape index: {}]
  %s5 = inlined_call_operand.vmem [shape: f32[32,4], index: 5, kind: input, shape index: {}]
  %s6 = inlined_call_operand.hbm [shape: f32[1,4], index: 6, kind: input, shape index: {}]
  %s7 = inlined_call_operand.vmem [shape: f32[8,4], index: 7, kind: output, shape index: {}]
  %s8 = sld [smem:[#allocation0]]
  $region46: #{policy_network_forward.1} parent=0
    _
  %s10 = ssub.s32 1, %s8
  %s11 = scalar_select 0, %s10, %s8
  $region1: #{policy_network_forward.1} parent=0
    #allocation2 [shape = 'u8[8192]{0}', space=vmem, size = 0x2000, scoped, tag = 'input window, operand 1, single buffered']
    #allocation3 [shape = 's32[1]{0}', space=sflag, size = 0x4, scoped, tag = 'scoped memory for policy_network_forward.1']
    #allocation4 [shape = 'u8[512]{0}', space=vmem, size = 0x400, scoped, tag = 'input window, operand 6, single buffered']
    #allocation5 [shape = 's32[1]{0}', space=sflag, size = 0x4, scoped, tag = 'scoped memory for policy_network_forward.1']
    %12 = vsyncpa [#allocation3], 0
    %13 = vsyncpa [#allocation5], 0
    // Predicated region
    $region2: #{policy_network_forward.1} parent=1 // pred_check
      _
    $region3: #{policy_network_forward.1} parent=1 // pred_check_branch
      %15 = sbr.rel (0) target = $region5
    $region4: #{policy_network_forward.1} parent=1 // pred_region
      _
    $region5: #{policy_network_forward.1} parent=1 // pred_fallthru
      _
    // Predicated region
    $region6: #{policy_network_forward.1} parent=1 // pred_check
      _
    $region7: #{policy_network_forward.1} parent=1 // pred_check_branch
      %17 = sbr.rel (0) target = $region9
    $region8: #{policy_network_forward.1} parent=1 // pred_region
      %s19 = ssub.s32 256, 256
      %20 = vsyncadd [#allocation3], %s19
      %s21 = sshll.u32 [#allocation2], 4
      %s22 = int_to_ptr.vmem [resolvable:$true] %s21
      %27 = dma.hbm_to_vmem [thread:$0]  %s1, 256, %s22, [#allocation3], 128, 128, 8
    $region9: #{policy_network_forward.1} parent=1 // pred_fallthru
      _
    // Predicated region
    $region10: #{policy_network_forward.1} parent=1 // pred_check
      _
    $region11: #{policy_network_forward.1} parent=1 // pred_check_branch
      %29 = sbr.rel (0) target = $region13
    $region12: #{policy_network_forward.1} parent=1 // pred_region
      _
    $region13: #{policy_network_forward.1} parent=1 // pred_fallthru
      _
    // Predicated region
    $region14: #{policy_network_forward.1} parent=1 // pred_check
      _
    $region15: #{policy_network_forward.1} parent=1 // pred_check_branch
      %31 = sbr.rel (0) target = $region17
    $region16: #{policy_network_forward.1} parent=1 // pred_region
      _
    $region17: #{policy_network_forward.1} parent=1 // pred_fallthru
      _
    // Predicated region
    $region18: #{policy_network_forward.1} parent=1 // pred_check
      _
    $region19: #{policy_network_forward.1} parent=1 // pred_check_branch
      %33 = sbr.rel (0) target = $region21
    $region20: #{policy_network_forward.1} parent=1 // pred_region
      _
    $region21: #{policy_network_forward.1} parent=1 // pred_fallthru
      _
    // Predicated region
    $region22: #{policy_network_forward.1} parent=1 // pred_check
      _
    $region23: #{policy_network_forward.1} parent=1 // pred_check_branch
      %35 = sbr.rel (0) target = $region25
    $region24: #{policy_network_forward.1} parent=1 // pred_region
      _
    $region25: #{policy_network_forward.1} parent=1 // pred_fallthru
      _
    // Predicated region
    $region26: #{policy_network_forward.1} parent=1 // pred_check
      _
    $region27: #{policy_network_forward.1} parent=1 // pred_check_branch
      %37 = sbr.rel (0) target = $region29
    $region28: #{policy_network_forward.1} parent=1 // pred_region
      %s39 = ssub.s32 16, 16
      %40 = vsyncadd [#allocation5], %s39
      %s42 = sshll.u32 [#allocation4], 4
      %s43 = int_to_ptr.vmem [resolvable:$true] %s42
      %45 = dma.hbm_to_vmem [thread:$0]  %s6, 16, %s43, [#allocation5]
    $region29: #{policy_network_forward.1} parent=1 // pred_fallthru
      _
    // Predicated region
    $region30: #{policy_network_forward.1} parent=1 // pred_check
      _
    $region31: #{policy_network_forward.1} parent=1 // pred_check_branch
      %47 = sbr.rel (0) target = $region33
    $region32: #{policy_network_forward.1} parent=1 // pred_region
      %48 = dma.done [#allocation3], 256
    $region33: #{policy_network_forward.1} parent=1 // pred_fallthru
      _
    // Predicated region
    $region34: #{policy_network_forward.1} parent=1 // pred_check
      _
    $region35: #{policy_network_forward.1} parent=1 // pred_check_branch
      %50 = sbr.rel (0) target = $region37
    $region36: #{policy_network_forward.1} parent=1 // pred_region
      %51 = dma.done [#allocation5], 16
    $region37: #{policy_network_forward.1} parent=1 // pred_fallthru
      _
    %v52 = vld [vmem:[%s0] sm:$0xff]
    %v53 = vld [vmem:[#allocation2] sm:$0xff]
    %v54 = vld [vmem:[#allocation2 + $0x8] sm:$0xff]
    %v55 = vld [vmem:[%s2] sm:$0x1]
    %v57 = vlaneseq
    %v58 = vshrl.u32 %v57, 7
    %v59 = vsub.s32 0, %v58
    %v60 = vrot.slane %v55, %v59
    %vm62 = vcmask 130048
    %v64 = vsel %vm62, %v52, 0
    %66 = vmatprep.subr.mxu0 0.0
    %67 = vmatpush1.msra.mxu0 0.0
    %68 = vmatprep.subr.mxu0 0.0
    %69 = vmatpush1.msra.mxu0 0.0
    %70 = vmatprep.subr.mxu0 0.0
    %71 = vmatpush1.msra.mxu0 0.0
    %72 = vmatprep.subr.mxu0 0.0
    %73 = vmatpush1.msra.mxu0 0.0
    %74 = vmatprep.subr.mxu0 0.0
    %75 = vmatpush1.msra.mxu0 0.0
    %76 = vmatprep.subr.mxu0 0.0
    %77 = vmatpush1.msra.mxu0 0.0
    %78 = vmatprep.subr.mxu0 0.0
    %79 = vmatpush1.msra.mxu0 0.0
    %80 = vmatprep.subr.mxu0 0.0
    %81 = vmatpush1.msra.mxu0 0.0
    %82 = vmatprep.subr.mxu0 0.0
    %83 = vmatpush1.msra.mxu0 0.0
    %84 = vmatprep.subr.mxu0 0.0
    %85 = vmatpush1.msra.mxu0 0.0
    %86 = vmatprep.subr.mxu0 0.0
    %87 = vmatpush1.msra.mxu0 0.0
    %88 = vmatprep.subr.mxu0 0.0
    %89 = vmatpush1.msra.mxu0 0.0
    %90 = vmatprep.subr.mxu0 0.0
    %91 = vmatpush1.msra.mxu0 0.0
    %92 = vmatprep.subr.mxu0 0.0
    %93 = vmatpush1.msra.mxu0 0.0
    %94 = vmatprep.subr.mxu0 0.0
    %v95 = vand.u32 %v54, 4294901760
    %96 = vmatpush1.msra.mxu0 %v95
    %97 = vmatprep.subr.mxu0 0.0
    %v98 = vand.u32 %v53, 4294901760
    %99 = vmatpush1.msra.mxu0 %v98
    %100 = vmatprep.subr.mxu0 0.0
    %101 = vmatpush2.msra.mxu0 0.0
    %102 = vmatprep.subr.mxu0 0.0
    %103 = vmatpush2.msra.mxu0 0.0
    %104 = vmatprep.subr.mxu0 0.0
    %105 = vmatpush2.msra.mxu0 0.0
    %106 = vmatprep.subr.mxu0 0.0
    %107 = vmatpush2.msra.mxu0 0.0
    %108 = vmatprep.subr.mxu0 0.0
    %109 = vmatpush2.msra.mxu0 0.0
    %110 = vmatprep.subr.mxu0 0.0
    %111 = vmatpush2.msra.mxu0 0.0
    %112 = vmatprep.subr.mxu0 0.0
    %113 = vmatpush2.msra.mxu0 0.0
    %114 = vmatprep.subr.mxu0 0.0
    %115 = vmatpush2.msra.mxu0 0.0
    %116 = vmatprep.subr.mxu0 0.0
    %117 = vmatpush2.msra.mxu0 0.0
    %118 = vmatprep.subr.mxu0 0.0
    %119 = vmatpush2.msra.mxu0 0.0
    %120 = vmatprep.subr.mxu0 0.0
    %121 = vmatpush2.msra.mxu0 0.0
    %122 = vmatprep.subr.mxu0 0.0
    %123 = vmatpush2.msra.mxu0 0.0
    %124 = vmatprep.subr.mxu0 0.0
    %125 = vmatpush2.msra.mxu0 0.0
    %126 = vmatprep.subr.mxu0 0.0
    %127 = vmatpush2.msra.mxu0 0.0
    %128 = vmatprep.subr.mxu0 0.0
    %129 = vmatpush2.msra.mxu0 0.0
    %130 = vmatprep.subr.mxu0 0.0
    %131 = vmatpush2.msra.mxu0 0.0
    %132 = vmatprep.mubr.f32.mxu0 0.0
    %v133 = vand.u32 %v64, 4294901760
    %v134 = vsub.f32 %v64, %v133
    %v135 = vand.u32 %v134, 4294901760
    %v136 = vsub.f32 %v134, %v135
    %v137 = vand.u32 %v136, 4294901760
    %138 = vmatmul.mubr.f32.gmra.mxu0 %v137
    %v139 = vpop.f32.mrf.mxu0
    %v140 = vadd.f32 %v60, %v139
    %v141 = vpop.f32.mrf.mxu0
    %142 = vdwg.mxu0
    %143 = vmatprep.subr.mxu0 0.0
    %144 = vmatpush1.msra.mxu0 0.0
    %145 = vmatprep.subr.mxu0 0.0
    %146 = vmatpush1.msra.mxu0 0.0
    %147 = vmatprep.subr.mxu0 0.0
    %148 = vmatpush1.msra.mxu0 0.0
    %149 = vmatprep.subr.mxu0 0.0
    %150 = vmatpush1.msra.mxu0 0.0
    %151 = vmatprep.subr.mxu0 0.0
    %152 = vmatpush1.msra.mxu0 0.0
    %153 = vmatprep.subr.mxu0 0.0
    %154 = vmatpush1.msra.mxu0 0.0
    %155 = vmatprep.subr.mxu0 0.0
    %156 = vmatpush1.msra.mxu0 0.0
    %157 = vmatprep.subr.mxu0 0.0
    %158 = vmatpush1.msra.mxu0 0.0
    %159 = vmatprep.subr.mxu0 0.0
    %160 = vmatpush1.msra.mxu0 0.0
    %161 = vmatprep.subr.mxu0 0.0
    %162 = vmatpush1.msra.mxu0 0.0
    %163 = vmatprep.subr.mxu0 0.0
    %164 = vmatpush1.msra.mxu0 0.0
    %165 = vmatprep.subr.mxu0 0.0
    %166 = vmatpush1.msra.mxu0 0.0
    %167 = vmatprep.subr.mxu0 0.0
    %168 = vmatpush1.msra.mxu0 0.0
    %169 = vmatprep.subr.mxu0 0.0
    %170 = vmatpush1.msra.mxu0 0.0
    %171 = vmatprep.subr.mxu0 0.0
    %v172 = vand.u32 %v54, 4294901760
    %v173 = vsub.f32 %v54, %v172
    %v174 = vand.u32 %v173, 4294901760
    %v175 = vsub.f32 %v173, %v174
    %v176 = vand.u32 %v175, 4294901760
    %177 = vmatpush1.msra.mxu0 %v176
    %178 = vmatprep.subr.mxu0 0.0
    %v179 = vand.u32 %v53, 4294901760
    %v180 = vsub.f32 %v53, %v179
    %v181 = vand.u32 %v180, 4294901760
    %v182 = vsub.f32 %v180, %v181
    %v183 = vand.u32 %v182, 4294901760
    %184 = vmatpush1.msra.mxu0 %v183
    %185 = vmatprep.subr.mxu0 0.0
    %186 = vmatpush2.msra.mxu0 0.0
    %187 = vmatprep.subr.mxu0 0.0
    %188 = vmatpush2.msra.mxu0 0.0
    %189 = vmatprep.subr.mxu0 0.0
    %190 = vmatpush2.msra.mxu0 0.0
    %191 = vmatprep.subr.mxu0 0.0
    %192 = vmatpush2.msra.mxu0 0.0
    %193 = vmatprep.subr.mxu0 0.0
    %194 = vmatpush2.msra.mxu0 0.0
    %195 = vmatprep.subr.mxu0 0.0
    %196 = vmatpush2.msra.mxu0 0.0
    %197 = vmatprep.subr.mxu0 0.0
    %198 = vmatpush2.msra.mxu0 0.0
    %199 = vmatprep.subr.mxu0 0.0
    %200 = vmatpush2.msra.mxu0 0.0
    %201 = vmatprep.subr.mxu0 0.0
    %202 = vmatpush2.msra.mxu0 0.0
    %203 = vmatprep.subr.mxu0 0.0
    %204 = vmatpush2.msra.mxu0 0.0
    %205 = vmatprep.subr.mxu0 0.0
    %206 = vmatpush2.msra.mxu0 0.0
    %207 = vmatprep.subr.mxu0 0.0
    %208 = vmatpush2.msra.mxu0 0.0
    %209 = vmatprep.subr.mxu0 0.0
    %210 = vmatpush2.msra.mxu0 0.0
    %211 = vmatprep.subr.mxu0 0.0
    %212 = vmatpush2.msra.mxu0 0.0
    %213 = vmatprep.subr.mxu0 0.0
    %214 = vmatpush2.msra.mxu0 0.0
    %215 = vmatprep.subr.mxu0 0.0
    %216 = vmatpush2.msra.mxu0 0.0
    %217 = vmatprep.mubr.f32.mxu0 0.0
    %v218 = vand.u32 %v64, 4294901760
    %219 = vmatmul.mubr.f32.gmra.mxu0 %v218
    %v220 = vpop.f32.mrf.mxu0
    %v221 = vadd.f32 %v140, %v220
    %v222 = vpop.f32.mrf.mxu0
    %223 = vdwg.mxu0
    %224 = vmatprep.subr.mxu0 0.0
    %225 = vmatpush1.msra.mxu0 0.0
    %226 = vmatprep.subr.mxu0 0.0
    %227 = vmatpush1.msra.mxu0 0.0
    %228 = vmatprep.subr.mxu0 0.0
    %229 = vmatpush1.msra.mxu0 0.0
    %230 = vmatprep.subr.mxu0 0.0
    %231 = vmatpush1.msra.mxu0 0.0
    %232 = vmatprep.subr.mxu0 0.0
    %233 = vmatpush1.msra.mxu0 0.0
    %234 = vmatprep.subr.mxu0 0.0
    %235 = vmatpush1.msra.mxu0 0.0
    %236 = vmatprep.subr.mxu0 0.0
    %237 = vmatpush1.msra.mxu0 0.0
    %238 = vmatprep.subr.mxu0 0.0
    %239 = vmatpush1.msra.mxu0 0.0
    %240 = vmatprep.subr.mxu0 0.0
    %241 = vmatpush1.msra.mxu0 0.0
    %242 = vmatprep.subr.mxu0 0.0
    %243 = vmatpush1.msra.mxu0 0.0
    %244 = vmatprep.subr.mxu0 0.0
    %245 = vmatpush1.msra.mxu0 0.0
    %246 = vmatprep.subr.mxu0 0.0
    %247 = vmatpush1.msra.mxu0 0.0
    %248 = vmatprep.subr.mxu0 0.0
    %249 = vmatpush1.msra.mxu0 0.0
    %250 = vmatprep.subr.mxu0 0.0
    %251 = vmatpush1.msra.mxu0 0.0
    %252 = vmatprep.subr.mxu0 0.0
    %v253 = vand.u32 %v54, 4294901760
    %v254 = vsub.f32 %v54, %v253
    %255 = vmatpush1.msra.mxu0 %v254
    %256 = vmatprep.subr.mxu0 0.0
    %v257 = vand.u32 %v53, 4294901760
    %v258 = vsub.f32 %v53, %v257
    %259 = vmatpush1.msra.mxu0 %v258
    %260 = vmatprep.subr.mxu0 0.0
    %261 = vmatpush2.msra.mxu0 0.0
    %262 = vmatprep.subr.mxu0 0.0
    %263 = vmatpush2.msra.mxu0 0.0
    %264 = vmatprep.subr.mxu0 0.0
    %265 = vmatpush2.msra.mxu0 0.0
    %266 = vmatprep.subr.mxu0 0.0
    %267 = vmatpush2.msra.mxu0 0.0
    %268 = vmatprep.subr.mxu0 0.0
    %269 = vmatpush2.msra.mxu0 0.0
    %270 = vmatprep.subr.mxu0 0.0
    %271 = vmatpush2.msra.mxu0 0.0
    %272 = vmatprep.subr.mxu0 0.0
    %273 = vmatpush2.msra.mxu0 0.0
    %274 = vmatprep.subr.mxu0 0.0
    %275 = vmatpush2.msra.mxu0 0.0
    %276 = vmatprep.subr.mxu0 0.0
    %277 = vmatpush2.msra.mxu0 0.0
    %278 = vmatprep.subr.mxu0 0.0
    %279 = vmatpush2.msra.mxu0 0.0
    %280 = vmatprep.subr.mxu0 0.0
    %281 = vmatpush2.msra.mxu0 0.0
    %282 = vmatprep.subr.mxu0 0.0
    %283 = vmatpush2.msra.mxu0 0.0
    %284 = vmatprep.subr.mxu0 0.0
    %285 = vmatpush2.msra.mxu0 0.0
    %286 = vmatprep.subr.mxu0 0.0
    %287 = vmatpush2.msra.mxu0 0.0
    %288 = vmatprep.subr.mxu0 0.0
    %289 = vmatpush2.msra.mxu0 0.0
    %290 = vmatprep.subr.mxu0 0.0
    %291 = vmatpush2.msra.mxu0 0.0
    %292 = vmatprep.mubr.f32.mxu0 0.0
    %v293 = vand.u32 %v64, 4294901760
    %v294 = vsub.f32 %v64, %v293
    %295 = vmatmul.mubr.f32.gmra.mxu0 %v294
    %v296 = vpop.f32.mrf.mxu0
    %v297 = vadd.f32 %v221, %v296
    %v298 = vpop.f32.mrf.mxu0
    %299 = vdwg.mxu0
    %300 = vmatprep.subr.mxu0 0.0
    %301 = vmatpush1.msra.mxu0 0.0
    %302 = vmatprep.subr.mxu0 0.0
    %303 = vmatpush1.msra.mxu0 0.0
    %304 = vmatprep.subr.mxu0 0.0
    %305 = vmatpush1.msra.mxu0 0.0
    %306 = vmatprep.subr.mxu0 0.0
    %307 = vmatpush1.msra.mxu0 0.0
    %308 = vmatprep.subr.mxu0 0.0
    %309 = vmatpush1.msra.mxu0 0.0
    %310 = vmatprep.subr.mxu0 0.0
    %311 = vmatpush1.msra.mxu0 0.0
    %312 = vmatprep.subr.mxu0 0.0
    %313 = vmatpush1.msra.mxu0 0.0
    %314 = vmatprep.subr.mxu0 0.0
    %315 = vmatpush1.msra.mxu0 0.0
    %316 = vmatprep.subr.mxu0 0.0
    %317 = vmatpush1.msra.mxu0 0.0
    %318 = vmatprep.subr.mxu0 0.0
    %319 = vmatpush1.msra.mxu0 0.0
    %320 = vmatprep.subr.mxu0 0.0
    %321 = vmatpush1.msra.mxu0 0.0
    %322 = vmatprep.subr.mxu0 0.0
    %323 = vmatpush1.msra.mxu0 0.0
    %324 = vmatprep.subr.mxu0 0.0
    %325 = vmatpush1.msra.mxu0 0.0
    %326 = vmatprep.subr.mxu0 0.0
    %327 = vmatpush1.msra.mxu0 0.0
    %328 = vmatprep.subr.mxu0 0.0
    %v329 = vand.u32 %v54, 4294901760
    %330 = vmatpush1.msra.mxu0 %v329
    %331 = vmatprep.subr.mxu0 0.0
    %v332 = vand.u32 %v53, 4294901760
    %333 = vmatpush1.msra.mxu0 %v332
    %334 = vmatprep.subr.mxu0 0.0
    %335 = vmatpush2.msra.mxu0 0.0
    %336 = vmatprep.subr.mxu0 0.0
    %337 = vmatpush2.msra.mxu0 0.0
    %338 = vmatprep.subr.mxu0 0.0
    %339 = vmatpush2.msra.mxu0 0.0
    %340 = vmatprep.subr.mxu0 0.0
    %341 = vmatpush2.msra.mxu0 0.0
    %342 = vmatprep.subr.mxu0 0.0
    %343 = vmatpush2.msra.mxu0 0.0
    %344 = vmatprep.subr.mxu0 0.0
    %345 = vmatpush2.msra.mxu0 0.0
    %346 = vmatprep.subr.mxu0 0.0
    %347 = vmatpush2.msra.mxu0 0.0
    %348 = vmatprep.subr.mxu0 0.0
    %349 = vmatpush2.msra.mxu0 0.0
    %350 = vmatprep.subr.mxu0 0.0
    %351 = vmatpush2.msra.mxu0 0.0
    %352 = vmatprep.subr.mxu0 0.0
    %353 = vmatpush2.msra.mxu0 0.0
    %354 = vmatprep.subr.mxu0 0.0
    %355 = vmatpush2.msra.mxu0 0.0
    %356 = vmatprep.subr.mxu0 0.0
    %357 = vmatpush2.msra.mxu0 0.0
    %358 = vmatprep.subr.mxu0 0.0
    %359 = vmatpush2.msra.mxu0 0.0
    %360 = vmatprep.subr.mxu0 0.0
    %361 = vmatpush2.msra.mxu0 0.0
    %362 = vmatprep.subr.mxu0 0.0
    %363 = vmatpush2.msra.mxu0 0.0
    %364 = vmatprep.subr.mxu0 0.0
    %365 = vmatpush2.msra.mxu0 0.0
    %366 = vmatprep.mubr.f32.mxu0 0.0
    %v367 = vand.u32 %v64, 4294901760
    %v368 = vsub.f32 %v64, %v367
    %v369 = vand.u32 %v368, 4294901760
    %370 = vmatmul.mubr.f32.gmra.mxu0 %v369
    %v371 = vpop.f32.mrf.mxu0
    %v372 = vadd.f32 %v297, %v371
    %v373 = vpop.f32.mrf.mxu0
    %374 = vdwg.mxu0
    %375 = vmatprep.subr.mxu0 0.0
    %376 = vmatpush1.msra.mxu0 0.0
    %377 = vmatprep.subr.mxu0 0.0
    %378 = vmatpush1.msra.mxu0 0.0
    %379 = vmatprep.subr.mxu0 0.0
    %380 = vmatpush1.msra.mxu0 0.0
    %381 = vmatprep.subr.mxu0 0.0
    %382 = vmatpush1.msra.mxu0 0.0
    %383 = vmatprep.subr.mxu0 0.0
    %384 = vmatpush1.msra.mxu0 0.0
    %385 = vmatprep.subr.mxu0 0.0
    %386 = vmatpush1.msra.mxu0 0.0
    %387 = vmatprep.subr.mxu0 0.0
    %388 = vmatpush1.msra.mxu0 0.0
    %389 = vmatprep.subr.mxu0 0.0
    %390 = vmatpush1.msra.mxu0 0.0
    %391 = vmatprep.subr.mxu0 0.0
    %392 = vmatpush1.msra.mxu0 0.0
    %393 = vmatprep.subr.mxu0 0.0
    %394 = vmatpush1.msra.mxu0 0.0
    %395 = vmatprep.subr.mxu0 0.0
    %396 = vmatpush1.msra.mxu0 0.0
    %397 = vmatprep.subr.mxu0 0.0
    %398 = vmatpush1.msra.mxu0 0.0
    %399 = vmatprep.subr.mxu0 0.0
    %400 = vmatpush1.msra.mxu0 0.0
    %401 = vmatprep.subr.mxu0 0.0
    %402 = vmatpush1.msra.mxu0 0.0
    %403 = vmatprep.subr.mxu0 0.0
    %v404 = vand.u32 %v54, 4294901760
    %v405 = vsub.f32 %v54, %v404
    %v406 = vand.u32 %v405, 4294901760
    %407 = vmatpush1.msra.mxu0 %v406
    %408 = vmatprep.subr.mxu0 0.0
    %v409 = vand.u32 %v53, 4294901760
    %v410 = vsub.f32 %v53, %v409
    %v411 = vand.u32 %v410, 4294901760
    %412 = vmatpush1.msra.mxu0 %v411
    %413 = vmatprep.subr.mxu0 0.0
    %414 = vmatpush2.msra.mxu0 0.0
    %415 = vmatprep.subr.mxu0 0.0
    %416 = vmatpush2.msra.mxu0 0.0
    %417 = vmatprep.subr.mxu0 0.0
    %418 = vmatpush2.msra.mxu0 0.0
    %419 = vmatprep.subr.mxu0 0.0
    %420 = vmatpush2.msra.mxu0 0.0
    %421 = vmatprep.subr.mxu0 0.0
    %422 = vmatpush2.msra.mxu0 0.0
    %423 = vmatprep.subr.mxu0 0.0
    %424 = vmatpush2.msra.mxu0 0.0
    %425 = vmatprep.subr.mxu0 0.0
    %426 = vmatpush2.msra.mxu0 0.0
    %427 = vmatprep.subr.mxu0 0.0
    %428 = vmatpush2.msra.mxu0 0.0
    %429 = vmatprep.subr.mxu0 0.0
    %430 = vmatpush2.msra.mxu0 0.0
    %431 = vmatprep.subr.mxu0 0.0
    %432 = vmatpush2.msra.mxu0 0.0
    %433 = vmatprep.subr.mxu0 0.0
    %434 = vmatpush2.msra.mxu0 0.0
    %435 = vmatprep.subr.mxu0 0.0
    %436 = vmatpush2.msra.mxu0 0.0
    %437 = vmatprep.subr.mxu0 0.0
    %438 = vmatpush2.msra.mxu0 0.0
    %439 = vmatprep.subr.mxu0 0.0
    %440 = vmatpush2.msra.mxu0 0.0
    %441 = vmatprep.subr.mxu0 0.0
    %442 = vmatpush2.msra.mxu0 0.0
    %443 = vmatprep.subr.mxu0 0.0
    %444 = vmatpush2.msra.mxu0 0.0
    %445 = vmatprep.mubr.f32.mxu0 0.0
    %v446 = vand.u32 %v64, 4294901760
    %447 = vmatmul.mubr.f32.gmra.mxu0 %v446
    %v448 = vpop.f32.mrf.mxu0
    %v449 = vadd.f32 %v372, %v448
    %v450 = vpop.f32.mrf.mxu0
    %451 = vdwg.mxu0
    %452 = vmatprep.subr.mxu0 0.0
    %453 = vmatpush1.msra.mxu0 0.0
    %454 = vmatprep.subr.mxu0 0.0
    %455 = vmatpush1.msra.mxu0 0.0
    %456 = vmatprep.subr.mxu0 0.0
    %457 = vmatpush1.msra.mxu0 0.0
    %458 = vmatprep.subr.mxu0 0.0
    %459 = vmatpush1.msra.mxu0 0.0
    %460 = vmatprep.subr.mxu0 0.0
    %461 = vmatpush1.msra.mxu0 0.0
    %462 = vmatprep.subr.mxu0 0.0
    %463 = vmatpush1.msra.mxu0 0.0
    %464 = vmatprep.subr.mxu0 0.0
    %465 = vmatpush1.msra.mxu0 0.0
    %466 = vmatprep.subr.mxu0 0.0
    %467 = vmatpush1.msra.mxu0 0.0
    %468 = vmatprep.subr.mxu0 0.0
    %469 = vmatpush1.msra.mxu0 0.0
    %470 = vmatprep.subr.mxu0 0.0
    %471 = vmatpush1.msra.mxu0 0.0
    %472 = vmatprep.subr.mxu0 0.0
    %473 = vmatpush1.msra.mxu0 0.0
    %474 = vmatprep.subr.mxu0 0.0
    %475 = vmatpush1.msra.mxu0 0.0
    %476 = vmatprep.subr.mxu0 0.0
    %477 = vmatpush1.msra.mxu0 0.0
    %478 = vmatprep.subr.mxu0 0.0
    %479 = vmatpush1.msra.mxu0 0.0
    %480 = vmatprep.subr.mxu0 0.0
    %v481 = vand.u32 %v54, 4294901760
    %482 = vmatpush1.msra.mxu0 %v481
    %483 = vmatprep.subr.mxu0 0.0
    %v484 = vand.u32 %v53, 4294901760
    %485 = vmatpush1.msra.mxu0 %v484
    %486 = vmatprep.subr.mxu0 0.0
    %487 = vmatpush2.msra.mxu0 0.0
    %488 = vmatprep.subr.mxu0 0.0
    %489 = vmatpush2.msra.mxu0 0.0
    %490 = vmatprep.subr.mxu0 0.0
    %491 = vmatpush2.msra.mxu0 0.0
    %492 = vmatprep.subr.mxu0 0.0
    %493 = vmatpush2.msra.mxu0 0.0
    %494 = vmatprep.subr.mxu0 0.0
    %495 = vmatpush2.msra.mxu0 0.0
    %496 = vmatprep.subr.mxu0 0.0
    %497 = vmatpush2.msra.mxu0 0.0
    %498 = vmatprep.subr.mxu0 0.0
    %499 = vmatpush2.msra.mxu0 0.0
    %500 = vmatprep.subr.mxu0 0.0
    %501 = vmatpush2.msra.mxu0 0.0
    %502 = vmatprep.subr.mxu0 0.0
    %503 = vmatpush2.msra.mxu0 0.0
    %504 = vmatprep.subr.mxu0 0.0
    %505 = vmatpush2.msra.mxu0 0.0
    %506 = vmatprep.subr.mxu0 0.0
    %507 = vmatpush2.msra.mxu0 0.0
    %508 = vmatprep.subr.mxu0 0.0
    %509 = vmatpush2.msra.mxu0 0.0
    %510 = vmatprep.subr.mxu0 0.0
    %511 = vmatpush2.msra.mxu0 0.0
    %512 = vmatprep.subr.mxu0 0.0
    %513 = vmatpush2.msra.mxu0 0.0
    %514 = vmatprep.subr.mxu0 0.0
    %515 = vmatpush2.msra.mxu0 0.0
    %516 = vmatprep.subr.mxu0 0.0
    %517 = vmatpush2.msra.mxu0 0.0
    %518 = vmatprep.mubr.f32.mxu0 0.0
    %v519 = vand.u32 %v64, 4294901760
    %520 = vmatmul.mubr.f32.gmra.mxu0 %v519
    %v521 = vpop.f32.mrf.mxu0
    %v522 = vadd.f32 %v449, %v521
    %v523 = vpop.f32.mrf.mxu0
    %524 = vdwg.mxu0
    %v525 = vmax.f32 %v522, 0.0
    %v526 = vld [vmem:[%s3] sm:$0xff]
    %v527 = vld [vmem:[%s3 + $0x8] sm:$0xff]
    %v528 = vld [vmem:[%s3 + $0x10] sm:$0xff]
    %v529 = vld [vmem:[%s3 + $0x18] sm:$0xff]
    %v530 = vld [vmem:[%s4] sm:$0x1]
    %v532 = vlaneseq
    %v533 = vshrl.u32 %v532, 7
    %v534 = vsub.s32 0, %v533
    %v535 = vrot.slane %v530, %v534
    %vm537 = vcmask 261120
    %v539 = vsel %vm537, %v525, 0
    %541 = vmatprep.subr.mxu0 0.0
    %542 = vmatpush1.msra.mxu0 0.0
    %543 = vmatprep.subr.mxu0 0.0
    %544 = vmatpush1.msra.mxu0 0.0
    %545 = vmatprep.subr.mxu0 0.0
    %546 = vmatpush1.msra.mxu0 0.0
    %547 = vmatprep.subr.mxu0 0.0
    %548 = vmatpush1.msra.mxu0 0.0
    %549 = vmatprep.subr.mxu0 0.0
    %550 = vmatpush1.msra.mxu0 0.0
    %551 = vmatprep.subr.mxu0 0.0
    %552 = vmatpush1.msra.mxu0 0.0
    %553 = vmatprep.subr.mxu0 0.0
    %554 = vmatpush1.msra.mxu0 0.0
    %555 = vmatprep.subr.mxu0 0.0
    %556 = vmatpush1.msra.mxu0 0.0
    %557 = vmatprep.subr.mxu0 0.0
    %558 = vmatpush1.msra.mxu0 0.0
    %559 = vmatprep.subr.mxu0 0.0
    %560 = vmatpush1.msra.mxu0 0.0
    %561 = vmatprep.subr.mxu0 0.0
    %562 = vmatpush1.msra.mxu0 0.0
    %563 = vmatprep.subr.mxu0 0.0
    %564 = vmatpush1.msra.mxu0 0.0
    %565 = vmatprep.subr.mxu0 0.0
    %v566 = vand.u32 %v529, 4294901760
    %567 = vmatpush1.msra.mxu0 %v566
    %568 = vmatprep.subr.mxu0 0.0
    %v569 = vand.u32 %v528, 4294901760
    %570 = vmatpush1.msra.mxu0 %v569
    %571 = vmatprep.subr.mxu0 0.0
    %v572 = vand.u32 %v527, 4294901760
    %573 = vmatpush1.msra.mxu0 %v572
    %574 = vmatprep.subr.mxu0 0.0
    %v575 = vand.u32 %v526, 4294901760
    %576 = vmatpush1.msra.mxu0 %v575
    %577 = vmatprep.subr.mxu0 0.0
    %578 = vmatpush2.msra.mxu0 0.0
    %579 = vmatprep.subr.mxu0 0.0
    %580 = vmatpush2.msra.mxu0 0.0
    %581 = vmatprep.subr.mxu0 0.0
    %582 = vmatpush2.msra.mxu0 0.0
    %583 = vmatprep.subr.mxu0 0.0
    %584 = vmatpush2.msra.mxu0 0.0
    %585 = vmatprep.subr.mxu0 0.0
    %586 = vmatpush2.msra.mxu0 0.0
    %587 = vmatprep.subr.mxu0 0.0
    %588 = vmatpush2.msra.mxu0 0.0
    %589 = vmatprep.subr.mxu0 0.0
    %590 = vmatpush2.msra.mxu0 0.0
    %591 = vmatprep.subr.mxu0 0.0
    %592 = vmatpush2.msra.mxu0 0.0
    %593 = vmatprep.subr.mxu0 0.0
    %594 = vmatpush2.msra.mxu0 0.0
    %595 = vmatprep.subr.mxu0 0.0
    %596 = vmatpush2.msra.mxu0 0.0
    %597 = vmatprep.subr.mxu0 0.0
    %598 = vmatpush2.msra.mxu0 0.0
    %599 = vmatprep.subr.mxu0 0.0
    %600 = vmatpush2.msra.mxu0 0.0
    %601 = vmatprep.subr.mxu0 0.0
    %602 = vmatpush2.msra.mxu0 0.0
    %603 = vmatprep.subr.mxu0 0.0
    %604 = vmatpush2.msra.mxu0 0.0
    %605 = vmatprep.subr.mxu0 0.0
    %606 = vmatpush2.msra.mxu0 0.0
    %607 = vmatprep.subr.mxu0 0.0
    %608 = vmatpush2.msra.mxu0 0.0
    %609 = vmatprep.mubr.f32.mxu0 0.0
    %v610 = vand.u32 %v539, 4294901760
    %v611 = vsub.f32 %v539, %v610
    %v612 = vand.u32 %v611, 4294901760
    %v613 = vsub.f32 %v611, %v612
    %v614 = vand.u32 %v613, 4294901760
    %615 = vmatmul.mubr.f32.gmra.mxu0 %v614
    %v616 = vpop.f32.mrf.mxu0
    %v617 = vadd.f32 %v535, %v616
    %v618 = vpop.f32.mrf.mxu0
    %619 = vdwg.mxu0
    %620 = vmatprep.subr.mxu0 0.0
    %621 = vmatpush1.msra.mxu0 0.0
    %622 = vmatprep.subr.mxu0 0.0
    %623 = vmatpush1.msra.mxu0 0.0
    %624 = vmatprep.subr.mxu0 0.0
    %625 = vmatpush1.msra.mxu0 0.0
    %626 = vmatprep.subr.mxu0 0.0
    %627 = vmatpush1.msra.mxu0 0.0
    %628 = vmatprep.subr.mxu0 0.0
    %629 = vmatpush1.msra.mxu0 0.0
    %630 = vmatprep.subr.mxu0 0.0
    %631 = vmatpush1.msra.mxu0 0.0
    %632 = vmatprep.subr.mxu0 0.0
    %633 = vmatpush1.msra.mxu0 0.0
    %634 = vmatprep.subr.mxu0 0.0
    %635 = vmatpush1.msra.mxu0 0.0
    %636 = vmatprep.subr.mxu0 0.0
    %637 = vmatpush1.msra.mxu0 0.0
    %638 = vmatprep.subr.mxu0 0.0
    %639 = vmatpush1.msra.mxu0 0.0
    %640 = vmatprep.subr.mxu0 0.0
    %641 = vmatpush1.msra.mxu0 0.0
    %642 = vmatprep.subr.mxu0 0.0
    %643 = vmatpush1.msra.mxu0 0.0
    %644 = vmatprep.subr.mxu0 0.0
    %v645 = vand.u32 %v529, 4294901760
    %v646 = vsub.f32 %v529, %v645
    %v647 = vand.u32 %v646, 4294901760
    %v648 = vsub.f32 %v646, %v647
    %v649 = vand.u32 %v648, 4294901760
    %650 = vmatpush1.msra.mxu0 %v649
    %651 = vmatprep.subr.mxu0 0.0
    %v652 = vand.u32 %v528, 4294901760
    %v653 = vsub.f32 %v528, %v652
    %v654 = vand.u32 %v653, 4294901760
    %v655 = vsub.f32 %v653, %v654
    %v656 = vand.u32 %v655, 4294901760
    %657 = vmatpush1.msra.mxu0 %v656
    %658 = vmatprep.subr.mxu0 0.0
    %v659 = vand.u32 %v527, 4294901760
    %v660 = vsub.f32 %v527, %v659
    %v661 = vand.u32 %v660, 4294901760
    %v662 = vsub.f32 %v660, %v661
    %v663 = vand.u32 %v662, 4294901760
    %664 = vmatpush1.msra.mxu0 %v663
    %665 = vmatprep.subr.mxu0 0.0
    %v666 = vand.u32 %v526, 4294901760
    %v667 = vsub.f32 %v526, %v666
    %v668 = vand.u32 %v667, 4294901760
    %v669 = vsub.f32 %v667, %v668
    %v670 = vand.u32 %v669, 4294901760
    %671 = vmatpush1.msra.mxu0 %v670
    %672 = vmatprep.subr.mxu0 0.0
    %673 = vmatpush2.msra.mxu0 0.0
    %674 = vmatprep.subr.mxu0 0.0
    %675 = vmatpush2.msra.mxu0 0.0
    %676 = vmatprep.subr.mxu0 0.0
    %677 = vmatpush2.msra.mxu0 0.0
    %678 = vmatprep.subr.mxu0 0.0
    %679 = vmatpush2.msra.mxu0 0.0
    %680 = vmatprep.subr.mxu0 0.0
    %681 = vmatpush2.msra.mxu0 0.0
    %682 = vmatprep.subr.mxu0 0.0
    %683 = vmatpush2.msra.mxu0 0.0
    %684 = vmatprep.subr.mxu0 0.0
    %685 = vmatpush2.msra.mxu0 0.0
    %686 = vmatprep.subr.mxu0 0.0
    %687 = vmatpush2.msra.mxu0 0.0
    %688 = vmatprep.subr.mxu0 0.0
    %689 = vmatpush2.msra.mxu0 0.0
    %690 = vmatprep.subr.mxu0 0.0
    %691 = vmatpush2.msra.mxu0 0.0
    %692 = vmatprep.subr.mxu0 0.0
    %693 = vmatpush2.msra.mxu0 0.0
    %694 = vmatprep.subr.mxu0 0.0
    %695 = vmatpush2.msra.mxu0 0.0
    %696 = vmatprep.subr.mxu0 0.0
    %697 = vmatpush2.msra.mxu0 0.0
    %698 = vmatprep.subr.mxu0 0.0
    %699 = vmatpush2.msra.mxu0 0.0
    %700 = vmatprep.subr.mxu0 0.0
    %701 = vmatpush2.msra.mxu0 0.0
    %702 = vmatprep.subr.mxu0 0.0
    %703 = vmatpush2.msra.mxu0 0.0
    %704 = vmatprep.mubr.f32.mxu0 0.0
    %v705 = vand.u32 %v539, 4294901760
    %706 = vmatmul.mubr.f32.gmra.mxu0 %v705
    %v707 = vpop.f32.mrf.mxu0
    %v708 = vadd.f32 %v617, %v707
    %v709 = vpop.f32.mrf.mxu0
    %710 = vdwg.mxu0
    %711 = vmatprep.subr.mxu0 0.0
    %712 = vmatpush1.msra.mxu0 0.0
    %713 = vmatprep.subr.mxu0 0.0
    %714 = vmatpush1.msra.mxu0 0.0
    %715 = vmatprep.subr.mxu0 0.0
    %716 = vmatpush1.msra.mxu0 0.0
    %717 = vmatprep.subr.mxu0 0.0
    %718 = vmatpush1.msra.mxu0 0.0
    %719 = vmatprep.subr.mxu0 0.0
    %720 = vmatpush1.msra.mxu0 0.0
    %721 = vmatprep.subr.mxu0 0.0
    %722 = vmatpush1.msra.mxu0 0.0
    %723 = vmatprep.subr.mxu0 0.0
    %724 = vmatpush1.msra.mxu0 0.0
    %725 = vmatprep.subr.mxu0 0.0
    %726 = vmatpush1.msra.mxu0 0.0
    %727 = vmatprep.subr.mxu0 0.0
    %728 = vmatpush1.msra.mxu0 0.0
    %729 = vmatprep.subr.mxu0 0.0
    %730 = vmatpush1.msra.mxu0 0.0
    %731 = vmatprep.subr.mxu0 0.0
    %732 = vmatpush1.msra.mxu0 0.0
    %733 = vmatprep.subr.mxu0 0.0
    %734 = vmatpush1.msra.mxu0 0.0
    %735 = vmatprep.subr.mxu0 0.0
    %v736 = vand.u32 %v529, 4294901760
    %v737 = vsub.f32 %v529, %v736
    %738 = vmatpush1.msra.mxu0 %v737
    %739 = vmatprep.subr.mxu0 0.0
    %v740 = vand.u32 %v528, 4294901760
    %v741 = vsub.f32 %v528, %v740
    %742 = vmatpush1.msra.mxu0 %v741
    %743 = vmatprep.subr.mxu0 0.0
    %v744 = vand.u32 %v527, 4294901760
    %v745 = vsub.f32 %v527, %v744
    %746 = vmatpush1.msra.mxu0 %v745
    %747 = vmatprep.subr.mxu0 0.0
    %v748 = vand.u32 %v526, 4294901760
    %v749 = vsub.f32 %v526, %v748
    %750 = vmatpush1.msra.mxu0 %v749
    %751 = vmatprep.subr.mxu0 0.0
    %752 = vmatpush2.msra.mxu0 0.0
    %753 = vmatprep.subr.mxu0 0.0
    %754 = vmatpush2.msra.mxu0 0.0
    %755 = vmatprep.subr.mxu0 0.0
    %756 = vmatpush2.msra.mxu0 0.0
    %757 = vmatprep.subr.mxu0 0.0
    %758 = vmatpush2.msra.mxu0 0.0
    %759 = vmatprep.subr.mxu0 0.0
    %760 = vmatpush2.msra.mxu0 0.0
    %761 = vmatprep.subr.mxu0 0.0
    %762 = vmatpush2.msra.mxu0 0.0
    %763 = vmatprep.subr.mxu0 0.0
    %764 = vmatpush2.msra.mxu0 0.0
    %765 = vmatprep.subr.mxu0 0.0
    %766 = vmatpush2.msra.mxu0 0.0
    %767 = vmatprep.subr.mxu0 0.0
    %768 = vmatpush2.msra.mxu0 0.0
    %769 = vmatprep.subr.mxu0 0.0
    %770 = vmatpush2.msra.mxu0 0.0
    %771 = vmatprep.subr.mxu0 0.0
    %772 = vmatpush2.msra.mxu0 0.0
    %773 = vmatprep.subr.mxu0 0.0
    %774 = vmatpush2.msra.mxu0 0.0
    %775 = vmatprep.subr.mxu0 0.0
    %776 = vmatpush2.msra.mxu0 0.0
    %777 = vmatprep.subr.mxu0 0.0
    %778 = vmatpush2.msra.mxu0 0.0
    %779 = vmatprep.subr.mxu0 0.0
    %780 = vmatpush2.msra.mxu0 0.0
    %781 = vmatprep.subr.mxu0 0.0
    %782 = vmatpush2.msra.mxu0 0.0
    %783 = vmatprep.mubr.f32.mxu0 0.0
    %v784 = vand.u32 %v539, 4294901760
    %v785 = vsub.f32 %v539, %v784
    %786 = vmatmul.mubr.f32.gmra.mxu0 %v785
    %v787 = vpop.f32.mrf.mxu0
    %v788 = vadd.f32 %v708, %v787
    %v789 = vpop.f32.mrf.mxu0
    %790 = vdwg.mxu0
    %791 = vmatprep.subr.mxu0 0.0
    %792 = vmatpush1.msra.mxu0 0.0
    %793 = vmatprep.subr.mxu0 0.0
    %794 = vmatpush1.msra.mxu0 0.0
    %795 = vmatprep.subr.mxu0 0.0
    %796 = vmatpush1.msra.mxu0 0.0
    %797 = vmatprep.subr.mxu0 0.0
    %798 = vmatpush1.msra.mxu0 0.0
    %799 = vmatprep.subr.mxu0 0.0
    %800 = vmatpush1.msra.mxu0 0.0
    %801 = vmatprep.subr.mxu0 0.0
    %802 = vmatpush1.msra.mxu0 0.0
    %803 = vmatprep.subr.mxu0 0.0
    %804 = vmatpush1.msra.mxu0 0.0
    %805 = vmatprep.subr.mxu0 0.0
    %806 = vmatpush1.msra.mxu0 0.0
    %807 = vmatprep.subr.mxu0 0.0
    %808 = vmatpush1.msra.mxu0 0.0
    %809 = vmatprep.subr.mxu0 0.0
    %810 = vmatpush1.msra.mxu0 0.0
    %811 = vmatprep.subr.mxu0 0.0
    %812 = vmatpush1.msra.mxu0 0.0
    %813 = vmatprep.subr.mxu0 0.0
    %814 = vmatpush1.msra.mxu0 0.0
    %815 = vmatprep.subr.mxu0 0.0
    %v816 = vand.u32 %v529, 4294901760
    %817 = vmatpush1.msra.mxu0 %v816
    %818 = vmatprep.subr.mxu0 0.0
    %v819 = vand.u32 %v528, 4294901760
    %820 = vmatpush1.msra.mxu0 %v819
    %821 = vmatprep.subr.mxu0 0.0
    %v822 = vand.u32 %v527, 4294901760
    %823 = vmatpush1.msra.mxu0 %v822
    %824 = vmatprep.subr.mxu0 0.0
    %v825 = vand.u32 %v526, 4294901760
    %826 = vmatpush1.msra.mxu0 %v825
    %827 = vmatprep.subr.mxu0 0.0
    %828 = vmatpush2.msra.mxu0 0.0
    %829 = vmatprep.subr.mxu0 0.0
    %830 = vmatpush2.msra.mxu0 0.0
    %831 = vmatprep.subr.mxu0 0.0
    %832 = vmatpush2.msra.mxu0 0.0
    %833 = vmatprep.subr.mxu0 0.0
    %834 = vmatpush2.msra.mxu0 0.0
    %835 = vmatprep.subr.mxu0 0.0
    %836 = vmatpush2.msra.mxu0 0.0
    %837 = vmatprep.subr.mxu0 0.0
    %838 = vmatpush2.msra.mxu0 0.0
    %839 = vmatprep.subr.mxu0 0.0
    %840 = vmatpush2.msra.mxu0 0.0
    %841 = vmatprep.subr.mxu0 0.0
    %842 = vmatpush2.msra.mxu0 0.0
    %843 = vmatprep.subr.mxu0 0.0
    %844 = vmatpush2.msra.mxu0 0.0
    %845 = vmatprep.subr.mxu0 0.0
    %846 = vmatpush2.msra.mxu0 0.0
    %847 = vmatprep.subr.mxu0 0.0
    %848 = vmatpush2.msra.mxu0 0.0
    %849 = vmatprep.subr.mxu0 0.0
    %850 = vmatpush2.msra.mxu0 0.0
    %851 = vmatprep.subr.mxu0 0.0
    %852 = vmatpush2.msra.mxu0 0.0
    %853 = vmatprep.subr.mxu0 0.0
    %854 = vmatpush2.msra.mxu0 0.0
    %855 = vmatprep.subr.mxu0 0.0
    %856 = vmatpush2.msra.mxu0 0.0
    %857 = vmatprep.subr.mxu0 0.0
    %858 = vmatpush2.msra.mxu0 0.0
    %859 = vmatprep.mubr.f32.mxu0 0.0
    %v860 = vand.u32 %v539, 4294901760
    %v861 = vsub.f32 %v539, %v860
    %v862 = vand.u32 %v861, 4294901760
    %863 = vmatmul.mubr.f32.gmra.mxu0 %v862
    %v864 = vpop.f32.mrf.mxu0
    %v865 = vadd.f32 %v788, %v864
    %v866 = vpop.f32.mrf.mxu0
    %867 = vdwg.mxu0
    %868 = vmatprep.subr.mxu0 0.0
    %869 = vmatpush1.msra.mxu0 0.0
    %870 = vmatprep.subr.mxu0 0.0
    %871 = vmatpush1.msra.mxu0 0.0
    %872 = vmatprep.subr.mxu0 0.0
    %873 = vmatpush1.msra.mxu0 0.0
    %874 = vmatprep.subr.mxu0 0.0
    %875 = vmatpush1.msra.mxu0 0.0
    %876 = vmatprep.subr.mxu0 0.0
    %877 = vmatpush1.msra.mxu0 0.0
    %878 = vmatprep.subr.mxu0 0.0
    %879 = vmatpush1.msra.mxu0 0.0
    %880 = vmatprep.subr.mxu0 0.0
    %881 = vmatpush1.msra.mxu0 0.0
    %882 = vmatprep.subr.mxu0 0.0
    %883 = vmatpush1.msra.mxu0 0.0
    %884 = vmatprep.subr.mxu0 0.0
    %885 = vmatpush1.msra.mxu0 0.0
    %886 = vmatprep.subr.mxu0 0.0
    %887 = vmatpush1.msra.mxu0 0.0
    %888 = vmatprep.subr.mxu0 0.0
    %889 = vmatpush1.msra.mxu0 0.0
    %890 = vmatprep.subr.mxu0 0.0
    %891 = vmatpush1.msra.mxu0 0.0
    %892 = vmatprep.subr.mxu0 0.0
    %v893 = vand.u32 %v529, 4294901760
    %v894 = vsub.f32 %v529, %v893
    %v895 = vand.u32 %v894, 4294901760
    %896 = vmatpush1.msra.mxu0 %v895
    %897 = vmatprep.subr.mxu0 0.0
    %v898 = vand.u32 %v528, 4294901760
    %v899 = vsub.f32 %v528, %v898
    %v900 = vand.u32 %v899, 4294901760
    %901 = vmatpush1.msra.mxu0 %v900
    %902 = vmatprep.subr.mxu0 0.0
    %v903 = vand.u32 %v527, 4294901760
    %v904 = vsub.f32 %v527, %v903
    %v905 = vand.u32 %v904, 4294901760
    %906 = vmatpush1.msra.mxu0 %v905
    %907 = vmatprep.subr.mxu0 0.0
    %v908 = vand.u32 %v526, 4294901760
    %v909 = vsub.f32 %v526, %v908
    %v910 = vand.u32 %v909, 4294901760
    %911 = vmatpush1.msra.mxu0 %v910
    %912 = vmatprep.subr.mxu0 0.0
    %913 = vmatpush2.msra.mxu0 0.0
    %914 = vmatprep.subr.mxu0 0.0
    %915 = vmatpush2.msra.mxu0 0.0
    %916 = vmatprep.subr.mxu0 0.0
    %917 = vmatpush2.msra.mxu0 0.0
    %918 = vmatprep.subr.mxu0 0.0
    %919 = vmatpush2.msra.mxu0 0.0
    %920 = vmatprep.subr.mxu0 0.0
    %921 = vmatpush2.msra.mxu0 0.0
    %922 = vmatprep.subr.mxu0 0.0
    %923 = vmatpush2.msra.mxu0 0.0
    %924 = vmatprep.subr.mxu0 0.0
    %925 = vmatpush2.msra.mxu0 0.0
    %926 = vmatprep.subr.mxu0 0.0
    %927 = vmatpush2.msra.mxu0 0.0
    %928 = vmatprep.subr.mxu0 0.0
    %929 = vmatpush2.msra.mxu0 0.0
    %930 = vmatprep.subr.mxu0 0.0
    %931 = vmatpush2.msra.mxu0 0.0
    %932 = vmatprep.subr.mxu0 0.0
    %933 = vmatpush2.msra.mxu0 0.0
    %934 = vmatprep.subr.mxu0 0.0
    %935 = vmatpush2.msra.mxu0 0.0
    %936 = vmatprep.subr.mxu0 0.0
    %937 = vmatpush2.msra.mxu0 0.0
    %938 = vmatprep.subr.mxu0 0.0
    %939 = vmatpush2.msra.mxu0 0.0
    %940 = vmatprep.subr.mxu0 0.0
    %941 = vmatpush2.msra.mxu0 0.0
    %942 = vmatprep.subr.mxu0 0.0
    %943 = vmatpush2.msra.mxu0 0.0
    %944 = vmatprep.mubr.f32.mxu0 0.0
    %v945 = vand.u32 %v539, 4294901760
    %946 = vmatmul.mubr.f32.gmra.mxu0 %v945
    %v947 = vpop.f32.mrf.mxu0
    %v948 = vadd.f32 %v865, %v947
    %v949 = vpop.f32.mrf.mxu0
    %950 = vdwg.mxu0
    %951 = vmatprep.subr.mxu0 0.0
    %952 = vmatpush1.msra.mxu0 0.0
    %953 = vmatprep.subr.mxu0 0.0
    %954 = vmatpush1.msra.mxu0 0.0
    %955 = vmatprep.subr.mxu0 0.0
    %956 = vmatpush1.msra.mxu0 0.0
    %957 = vmatprep.subr.mxu0 0.0
    %958 = vmatpush1.msra.mxu0 0.0
    %959 = vmatprep.subr.mxu0 0.0
    %960 = vmatpush1.msra.mxu0 0.0
    %961 = vmatprep.subr.mxu0 0.0
    %962 = vmatpush1.msra.mxu0 0.0
    %963 = vmatprep.subr.mxu0 0.0
    %964 = vmatpush1.msra.mxu0 0.0
    %965 = vmatprep.subr.mxu0 0.0
    %966 = vmatpush1.msra.mxu0 0.0
    %967 = vmatprep.subr.mxu0 0.0
    %968 = vmatpush1.msra.mxu0 0.0
    %969 = vmatprep.subr.mxu0 0.0
    %970 = vmatpush1.msra.mxu0 0.0
    %971 = vmatprep.subr.mxu0 0.0
    %972 = vmatpush1.msra.mxu0 0.0
    %973 = vmatprep.subr.mxu0 0.0
    %974 = vmatpush1.msra.mxu0 0.0
    %975 = vmatprep.subr.mxu0 0.0
    %v976 = vand.u32 %v529, 4294901760
    %977 = vmatpush1.msra.mxu0 %v976
    %978 = vmatprep.subr.mxu0 0.0
    %v979 = vand.u32 %v528, 4294901760
    %980 = vmatpush1.msra.mxu0 %v979
    %981 = vmatprep.subr.mxu0 0.0
    %v982 = vand.u32 %v527, 4294901760
    %983 = vmatpush1.msra.mxu0 %v982
    %984 = vmatprep.subr.mxu0 0.0
    %v985 = vand.u32 %v526, 4294901760
    %986 = vmatpush1.msra.mxu0 %v985
    %987 = vmatprep.subr.mxu0 0.0
    %988 = vmatpush2.msra.mxu0 0.0
    %989 = vmatprep.subr.mxu0 0.0
    %990 = vmatpush2.msra.mxu0 0.0
    %991 = vmatprep.subr.mxu0 0.0
    %992 = vmatpush2.msra.mxu0 0.0
    %993 = vmatprep.subr.mxu0 0.0
    %994 = vmatpush2.msra.mxu0 0.0
    %995 = vmatprep.subr.mxu0 0.0
    %996 = vmatpush2.msra.mxu0 0.0
    %997 = vmatprep.subr.mxu0 0.0
    %998 = vmatpush2.msra.mxu0 0.0
    %999 = vmatprep.subr.mxu0 0.0
    %1000 = vmatpush2.msra.mxu0 0.0
    %1001 = vmatprep.subr.mxu0 0.0
    %1002 = vmatpush2.msra.mxu0 0.0
    %1003 = vmatprep.subr.mxu0 0.0
    %1004 = vmatpush2.msra.mxu0 0.0
    %1005 = vmatprep.subr.mxu0 0.0
    %1006 = vmatpush2.msra.mxu0 0.0
    %1007 = vmatprep.subr.mxu0 0.0
    %1008 = vmatpush2.msra.mxu0 0.0
    %1009 = vmatprep.subr.mxu0 0.0
    %1010 = vmatpush2.msra.mxu0 0.0
    %1011 = vmatprep.subr.mxu0 0.0
    %1012 = vmatpush2.msra.mxu0 0.0
    %1013 = vmatprep.subr.mxu0 0.0
    %1014 = vmatpush2.msra.mxu0 0.0
    %1015 = vmatprep.subr.mxu0 0.0
    %1016 = vmatpush2.msra.mxu0 0.0
    %1017 = vmatprep.subr.mxu0 0.0
    %1018 = vmatpush2.msra.mxu0 0.0
    %1019 = vmatprep.mubr.f32.mxu0 0.0
    %v1020 = vand.u32 %v539, 4294901760
    %1021 = vmatmul.mubr.f32.gmra.mxu0 %v1020
    %v1022 = vpop.f32.mrf.mxu0
    %v1023 = vadd.f32 %v948, %v1022
    %v1024 = vpop.f32.mrf.mxu0
    %1025 = vdwg.mxu0
    %v1026 = vmax.f32 %v1023, 0.0
    %v1027 = vld [vmem:[%s5] sm:$0xff]
    %v1028 = vld [vmem:[%s5 + $0x8] sm:$0xff]
    %v1029 = vld [vmem:[%s5 + $0x10] sm:$0xff]
    %v1030 = vld [vmem:[%s5 + $0x18] sm:$0xff]
    %v1031 = vld [vmem:[#allocation4] sm:$0x1]
    %v1033 = vlaneseq
    %v1034 = vshrl.u32 %v1033, 7
    %v1035 = vsub.s32 0, %v1034
    %v1036 = vrot.slane %v1031, %v1035
    %v1039 = vsel %vm537, %v1026, 0
    %1041 = vmatprep.subr.mxu0 0.0
    %1042 = vmatpush1.msra.mxu0 0.0
    %1043 = vmatprep.subr.mxu0 0.0
    %1044 = vmatpush1.msra.mxu0 0.0
    %1045 = vmatprep.subr.mxu0 0.0
    %1046 = vmatpush1.msra.mxu0 0.0
    %1047 = vmatprep.subr.mxu0 0.0
    %1048 = vmatpush1.msra.mxu0 0.0
    %1049 = vmatprep.subr.mxu0 0.0
    %1050 = vmatpush1.msra.mxu0 0.0
    %1051 = vmatprep.subr.mxu0 0.0
    %1052 = vmatpush1.msra.mxu0 0.0
    %1053 = vmatprep.subr.mxu0 0.0
    %1054 = vmatpush1.msra.mxu0 0.0
    %1055 = vmatprep.subr.mxu0 0.0
    %1056 = vmatpush1.msra.mxu0 0.0
    %1057 = vmatprep.subr.mxu0 0.0
    %1058 = vmatpush1.msra.mxu0 0.0
    %1059 = vmatprep.subr.mxu0 0.0
    %1060 = vmatpush1.msra.mxu0 0.0
    %1061 = vmatprep.subr.mxu0 0.0
    %1062 = vmatpush1.msra.mxu0 0.0
    %1063 = vmatprep.subr.mxu0 0.0
    %1064 = vmatpush1.msra.mxu0 0.0
    %1065 = vmatprep.subr.mxu0 0.0
    %v1066 = vand.u32 %v1030, 4294901760
    %1067 = vmatpush1.msra.mxu0 %v1066
    %1068 = vmatprep.subr.mxu0 0.0
    %v1069 = vand.u32 %v1029, 4294901760
    %1070 = vmatpush1.msra.mxu0 %v1069
    %1071 = vmatprep.subr.mxu0 0.0
    %v1072 = vand.u32 %v1028, 4294901760
    %1073 = vmatpush1.msra.mxu0 %v1072
    %1074 = vmatprep.subr.mxu0 0.0
    %v1075 = vand.u32 %v1027, 4294901760
    %1076 = vmatpush1.msra.mxu0 %v1075
    %1077 = vmatprep.subr.mxu0 0.0
    %1078 = vmatpush2.msra.mxu0 0.0
    %1079 = vmatprep.subr.mxu0 0.0
    %1080 = vmatpush2.msra.mxu0 0.0
    %1081 = vmatprep.subr.mxu0 0.0
    %1082 = vmatpush2.msra.mxu0 0.0
    %1083 = vmatprep.subr.mxu0 0.0
    %1084 = vmatpush2.msra.mxu0 0.0
    %1085 = vmatprep.subr.mxu0 0.0
    %1086 = vmatpush2.msra.mxu0 0.0
    %1087 = vmatprep.subr.mxu0 0.0
    %1088 = vmatpush2.msra.mxu0 0.0
    %1089 = vmatprep.subr.mxu0 0.0
    %1090 = vmatpush2.msra.mxu0 0.0
    %1091 = vmatprep.subr.mxu0 0.0
    %1092 = vmatpush2.msra.mxu0 0.0
    %1093 = vmatprep.subr.mxu0 0.0
    %1094 = vmatpush2.msra.mxu0 0.0
    %1095 = vmatprep.subr.mxu0 0.0
    %1096 = vmatpush2.msra.mxu0 0.0
    %1097 = vmatprep.subr.mxu0 0.0
    %1098 = vmatpush2.msra.mxu0 0.0
    %1099 = vmatprep.subr.mxu0 0.0
    %1100 = vmatpush2.msra.mxu0 0.0
    %1101 = vmatprep.subr.mxu0 0.0
    %1102 = vmatpush2.msra.mxu0 0.0
    %1103 = vmatprep.subr.mxu0 0.0
    %1104 = vmatpush2.msra.mxu0 0.0
    %1105 = vmatprep.subr.mxu0 0.0
    %1106 = vmatpush2.msra.mxu0 0.0
    %1107 = vmatprep.subr.mxu0 0.0
    %1108 = vmatpush2.msra.mxu0 0.0
    %1109 = vmatprep.mubr.f32.mxu0 0.0
    %v1110 = vand.u32 %v1039, 4294901760
    %v1111 = vsub.f32 %v1039, %v1110
    %v1112 = vand.u32 %v1111, 4294901760
    %v1113 = vsub.f32 %v1111, %v1112
    %v1114 = vand.u32 %v1113, 4294901760
    %1115 = vmatmul.mubr.f32.gmra.mxu0 %v1114
    %v1116 = vpop.f32.mrf.mxu0
    %v1117 = vadd.f32 %v1036, %v1116
    %v1118 = vpop.f32.mrf.mxu0
    %1119 = vdwg.mxu0
    %1120 = vmatprep.subr.mxu0 0.0
    %1121 = vmatpush1.msra.mxu0 0.0
    %1122 = vmatprep.subr.mxu0 0.0
    %1123 = vmatpush1.msra.mxu0 0.0
    %1124 = vmatprep.subr.mxu0 0.0
    %1125 = vmatpush1.msra.mxu0 0.0
    %1126 = vmatprep.subr.mxu0 0.0
    %1127 = vmatpush1.msra.mxu0 0.0
    %1128 = vmatprep.subr.mxu0 0.0
    %1129 = vmatpush1.msra.mxu0 0.0
    %1130 = vmatprep.subr.mxu0 0.0
    %1131 = vmatpush1.msra.mxu0 0.0
    %1132 = vmatprep.subr.mxu0 0.0
    %1133 = vmatpush1.msra.mxu0 0.0
    %1134 = vmatprep.subr.mxu0 0.0
    %1135 = vmatpush1.msra.mxu0 0.0
    %1136 = vmatprep.subr.mxu0 0.0
    %1137 = vmatpush1.msra.mxu0 0.0
    %1138 = vmatprep.subr.mxu0 0.0
    %1139 = vmatpush1.msra.mxu0 0.0
    %1140 = vmatprep.subr.mxu0 0.0
    %1141 = vmatpush1.msra.mxu0 0.0
    %1142 = vmatprep.subr.mxu0 0.0
    %1143 = vmatpush1.msra.mxu0 0.0
    %1144 = vmatprep.subr.mxu0 0.0
    %v1145 = vand.u32 %v1030, 4294901760
    %v1146 = vsub.f32 %v1030, %v1145
    %v1147 = vand.u32 %v1146, 4294901760
    %v1148 = vsub.f32 %v1146, %v1147
    %v1149 = vand.u32 %v1148, 4294901760
    %1150 = vmatpush1.msra.mxu0 %v1149
    %1151 = vmatprep.subr.mxu0 0.0
    %v1152 = vand.u32 %v1029, 4294901760
    %v1153 = vsub.f32 %v1029, %v1152
    %v1154 = vand.u32 %v1153, 4294901760
    %v1155 = vsub.f32 %v1153, %v1154
    %v1156 = vand.u32 %v1155, 4294901760
    %1157 = vmatpush1.msra.mxu0 %v1156
    %1158 = vmatprep.subr.mxu0 0.0
    %v1159 = vand.u32 %v1028, 4294901760
    %v1160 = vsub.f32 %v1028, %v1159
    %v1161 = vand.u32 %v1160, 4294901760
    %v1162 = vsub.f32 %v1160, %v1161
    %v1163 = vand.u32 %v1162, 4294901760
    %1164 = vmatpush1.msra.mxu0 %v1163
    %1165 = vmatprep.subr.mxu0 0.0
    %v1166 = vand.u32 %v1027, 4294901760
    %v1167 = vsub.f32 %v1027, %v1166
    %v1168 = vand.u32 %v1167, 4294901760
    %v1169 = vsub.f32 %v1167, %v1168
    %v1170 = vand.u32 %v1169, 4294901760
    %1171 = vmatpush1.msra.mxu0 %v1170
    %1172 = vmatprep.subr.mxu0 0.0
    %1173 = vmatpush2.msra.mxu0 0.0
    %1174 = vmatprep.subr.mxu0 0.0
    %1175 = vmatpush2.msra.mxu0 0.0
    %1176 = vmatprep.subr.mxu0 0.0
    %1177 = vmatpush2.msra.mxu0 0.0
    %1178 = vmatprep.subr.mxu0 0.0
    %1179 = vmatpush2.msra.mxu0 0.0
    %1180 = vmatprep.subr.mxu0 0.0
    %1181 = vmatpush2.msra.mxu0 0.0
    %1182 = vmatprep.subr.mxu0 0.0
    %1183 = vmatpush2.msra.mxu0 0.0
    %1184 = vmatprep.subr.mxu0 0.0
    %1185 = vmatpush2.msra.mxu0 0.0
    %1186 = vmatprep.subr.mxu0 0.0
    %1187 = vmatpush2.msra.mxu0 0.0
    %1188 = vmatprep.subr.mxu0 0.0
    %1189 = vmatpush2.msra.mxu0 0.0
    %1190 = vmatprep.subr.mxu0 0.0
    %1191 = vmatpush2.msra.mxu0 0.0
    %1192 = vmatprep.subr.mxu0 0.0
    %1193 = vmatpush2.msra.mxu0 0.0
    %1194 = vmatprep.subr.mxu0 0.0
    %1195 = vmatpush2.msra.mxu0 0.0
    %1196 = vmatprep.subr.mxu0 0.0
    %1197 = vmatpush2.msra.mxu0 0.0
    %1198 = vmatprep.subr.mxu0 0.0
    %1199 = vmatpush2.msra.mxu0 0.0
    %1200 = vmatprep.subr.mxu0 0.0
    %1201 = vmatpush2.msra.mxu0 0.0
    %1202 = vmatprep.subr.mxu0 0.0
    %1203 = vmatpush2.msra.mxu0 0.0
    %1204 = vmatprep.mubr.f32.mxu0 0.0
    %v1205 = vand.u32 %v1039, 4294901760
    %1206 = vmatmul.mubr.f32.gmra.mxu0 %v1205
    %v1207 = vpop.f32.mrf.mxu0
    %v1208 = vadd.f32 %v1117, %v1207
    %v1209 = vpop.f32.mrf.mxu0
    %1210 = vdwg.mxu0
    %1211 = vmatprep.subr.mxu0 0.0
    %1212 = vmatpush1.msra.mxu0 0.0
    %1213 = vmatprep.subr.mxu0 0.0
    %1214 = vmatpush1.msra.mxu0 0.0
    %1215 = vmatprep.subr.mxu0 0.0
    %1216 = vmatpush1.msra.mxu0 0.0
    %1217 = vmatprep.subr.mxu0 0.0
    %1218 = vmatpush1.msra.mxu0 0.0
    %1219 = vmatprep.subr.mxu0 0.0
    %1220 = vmatpush1.msra.mxu0 0.0
    %1221 = vmatprep.subr.mxu0 0.0
    %1222 = vmatpush1.msra.mxu0 0.0
    %1223 = vmatprep.subr.mxu0 0.0
    %1224 = vmatpush1.msra.mxu0 0.0
    %1225 = vmatprep.subr.mxu0 0.0
    %1226 = vmatpush1.msra.mxu0 0.0
    %1227 = vmatprep.subr.mxu0 0.0
    %1228 = vmatpush1.msra.mxu0 0.0
    %1229 = vmatprep.subr.mxu0 0.0
    %1230 = vmatpush1.msra.mxu0 0.0
    %1231 = vmatprep.subr.mxu0 0.0
    %1232 = vmatpush1.msra.mxu0 0.0
    %1233 = vmatprep.subr.mxu0 0.0
    %1234 = vmatpush1.msra.mxu0 0.0
    %1235 = vmatprep.subr.mxu0 0.0
    %v1236 = vand.u32 %v1030, 4294901760
    %v1237 = vsub.f32 %v1030, %v1236
    %1238 = vmatpush1.msra.mxu0 %v1237
    %1239 = vmatprep.subr.mxu0 0.0
    %v1240 = vand.u32 %v1029, 4294901760
    %v1241 = vsub.f32 %v1029, %v1240
    %1242 = vmatpush1.msra.mxu0 %v1241
    %1243 = vmatprep.subr.mxu0 0.0
    %v1244 = vand.u32 %v1028, 4294901760
    %v1245 = vsub.f32 %v1028, %v1244
    %1246 = vmatpush1.msra.mxu0 %v1245
    %1247 = vmatprep.subr.mxu0 0.0
    %v1248 = vand.u32 %v1027, 4294901760
    %v1249 = vsub.f32 %v1027, %v1248
    %1250 = vmatpush1.msra.mxu0 %v1249
    %1251 = vmatprep.subr.mxu0 0.0
    %1252 = vmatpush2.msra.mxu0 0.0
    %1253 = vmatprep.subr.mxu0 0.0
    %1254 = vmatpush2.msra.mxu0 0.0
    %1255 = vmatprep.subr.mxu0 0.0
    %1256 = vmatpush2.msra.mxu0 0.0
    %1257 = vmatprep.subr.mxu0 0.0
    %1258 = vmatpush2.msra.mxu0 0.0
    %1259 = vmatprep.subr.mxu0 0.0
    %1260 = vmatpush2.msra.mxu0 0.0
    %1261 = vmatprep.subr.mxu0 0.0
    %1262 = vmatpush2.msra.mxu0 0.0
    %1263 = vmatprep.subr.mxu0 0.0
    %1264 = vmatpush2.msra.mxu0 0.0
    %1265 = vmatprep.subr.mxu0 0.0
    %1266 = vmatpush2.msra.mxu0 0.0
    %1267 = vmatprep.subr.mxu0 0.0
    %1268 = vmatpush2.msra.mxu0 0.0
    %1269 = vmatprep.subr.mxu0 0.0
    %1270 = vmatpush2.msra.mxu0 0.0
    %1271 = vmatprep.subr.mxu0 0.0
    %1272 = vmatpush2.msra.mxu0 0.0
    %1273 = vmatprep.subr.mxu0 0.0
    %1274 = vmatpush2.msra.mxu0 0.0
    %1275 = vmatprep.subr.mxu0 0.0
    %1276 = vmatpush2.msra.mxu0 0.0
    %1277 = vmatprep.subr.mxu0 0.0
    %1278 = vmatpush2.msra.mxu0 0.0
    %1279 = vmatprep.subr.mxu0 0.0
    %1280 = vmatpush2.msra.mxu0 0.0
    %1281 = vmatprep.subr.mxu0 0.0
    %1282 = vmatpush2.msra.mxu0 0.0
    %1283 = vmatprep.mubr.f32.mxu0 0.0
    %v1284 = vand.u32 %v1039, 4294901760
    %v1285 = vsub.f32 %v1039, %v1284
    %1286 = vmatmul.mubr.f32.gmra.mxu0 %v1285
    %v1287 = vpop.f32.mrf.mxu0
    %v1288 = vadd.f32 %v1208, %v1287
    %v1289 = vpop.f32.mrf.mxu0
    %1290 = vdwg.mxu0
    %1291 = vmatprep.subr.mxu0 0.0
    %1292 = vmatpush1.msra.mxu0 0.0
    %1293 = vmatprep.subr.mxu0 0.0
    %1294 = vmatpush1.msra.mxu0 0.0
    %1295 = vmatprep.subr.mxu0 0.0
    %1296 = vmatpush1.msra.mxu0 0.0
    %1297 = vmatprep.subr.mxu0 0.0
    %1298 = vmatpush1.msra.mxu0 0.0
    %1299 = vmatprep.subr.mxu0 0.0
    %1300 = vmatpush1.msra.mxu0 0.0
    %1301 = vmatprep.subr.mxu0 0.0
    %1302 = vmatpush1.msra.mxu0 0.0
    %1303 = vmatprep.subr.mxu0 0.0
    %1304 = vmatpush1.msra.mxu0 0.0
    %1305 = vmatprep.subr.mxu0 0.0
    %1306 = vmatpush1.msra.mxu0 0.0
    %1307 = vmatprep.subr.mxu0 0.0
    %1308 = vmatpush1.msra.mxu0 0.0
    %1309 = vmatprep.subr.mxu0 0.0
    %1310 = vmatpush1.msra.mxu0 0.0
    %1311 = vmatprep.subr.mxu0 0.0
    %1312 = vmatpush1.msra.mxu0 0.0
    %1313 = vmatprep.subr.mxu0 0.0
    %1314 = vmatpush1.msra.mxu0 0.0
    %1315 = vmatprep.subr.mxu0 0.0
    %v1316 = vand.u32 %v1030, 4294901760
    %1317 = vmatpush1.msra.mxu0 %v1316
    %1318 = vmatprep.subr.mxu0 0.0
    %v1319 = vand.u32 %v1029, 4294901760
    %1320 = vmatpush1.msra.mxu0 %v1319
    %1321 = vmatprep.subr.mxu0 0.0
    %v1322 = vand.u32 %v1028, 4294901760
    %1323 = vmatpush1.msra.mxu0 %v1322
    %1324 = vmatprep.subr.mxu0 0.0
    %v1325 = vand.u32 %v1027, 4294901760
    %1326 = vmatpush1.msra.mxu0 %v1325
    %1327 = vmatprep.subr.mxu0 0.0
    %1328 = vmatpush2.msra.mxu0 0.0
    %1329 = vmatprep.subr.mxu0 0.0
    %1330 = vmatpush2.msra.mxu0 0.0
    %1331 = vmatprep.subr.mxu0 0.0
    %1332 = vmatpush2.msra.mxu0 0.0
    %1333 = vmatprep.subr.mxu0 0.0
    %1334 = vmatpush2.msra.mxu0 0.0
    %1335 = vmatprep.subr.mxu0 0.0
    %1336 = vmatpush2.msra.mxu0 0.0
    %1337 = vmatprep.subr.mxu0 0.0
    %1338 = vmatpush2.msra.mxu0 0.0
    %1339 = vmatprep.subr.mxu0 0.0
    %1340 = vmatpush2.msra.mxu0 0.0
    %1341 = vmatprep.subr.mxu0 0.0
    %1342 = vmatpush2.msra.mxu0 0.0
    %1343 = vmatprep.subr.mxu0 0.0
    %1344 = vmatpush2.msra.mxu0 0.0
    %1345 = vmatprep.subr.mxu0 0.0
    %1346 = vmatpush2.msra.mxu0 0.0
    %1347 = vmatprep.subr.mxu0 0.0
    %1348 = vmatpush2.msra.mxu0 0.0
    %1349 = vmatprep.subr.mxu0 0.0
    %1350 = vmatpush2.msra.mxu0 0.0
    %1351 = vmatprep.subr.mxu0 0.0
    %1352 = vmatpush2.msra.mxu0 0.0
    %1353 = vmatprep.subr.mxu0 0.0
    %1354 = vmatpush2.msra.mxu0 0.0
    %1355 = vmatprep.subr.mxu0 0.0
    %1356 = vmatpush2.msra.mxu0 0.0
    %1357 = vmatprep.subr.mxu0 0.0
    %1358 = vmatpush2.msra.mxu0 0.0
    %1359 = vmatprep.mubr.f32.mxu0 0.0
    %v1360 = vand.u32 %v1039, 4294901760
    %v1361 = vsub.f32 %v1039, %v1360
    %v1362 = vand.u32 %v1361, 4294901760
    %1363 = vmatmul.mubr.f32.gmra.mxu0 %v1362
    %v1364 = vpop.f32.mrf.mxu0
    %v1365 = vadd.f32 %v1288, %v1364
    %v1366 = vpop.f32.mrf.mxu0
    %1367 = vdwg.mxu0
    %1368 = vmatprep.subr.mxu0 0.0
    %1369 = vmatpush1.msra.mxu0 0.0
    %1370 = vmatprep.subr.mxu0 0.0
    %1371 = vmatpush1.msra.mxu0 0.0
    %1372 = vmatprep.subr.mxu0 0.0
    %1373 = vmatpush1.msra.mxu0 0.0
    %1374 = vmatprep.subr.mxu0 0.0
    %1375 = vmatpush1.msra.mxu0 0.0
    %1376 = vmatprep.subr.mxu0 0.0
    %1377 = vmatpush1.msra.mxu0 0.0
    %1378 = vmatprep.subr.mxu0 0.0
    %1379 = vmatpush1.msra.mxu0 0.0
    %1380 = vmatprep.subr.mxu0 0.0
    %1381 = vmatpush1.msra.mxu0 0.0
    %1382 = vmatprep.subr.mxu0 0.0
    %1383 = vmatpush1.msra.mxu0 0.0
    %1384 = vmatprep.subr.mxu0 0.0
    %1385 = vmatpush1.msra.mxu0 0.0
    %1386 = vmatprep.subr.mxu0 0.0
    %1387 = vmatpush1.msra.mxu0 0.0
    %1388 = vmatprep.subr.mxu0 0.0
    %1389 = vmatpush1.msra.mxu0 0.0
    %1390 = vmatprep.subr.mxu0 0.0
    %1391 = vmatpush1.msra.mxu0 0.0
    %1392 = vmatprep.subr.mxu0 0.0
    %v1393 = vand.u32 %v1030, 4294901760
    %v1394 = vsub.f32 %v1030, %v1393
    %v1395 = vand.u32 %v1394, 4294901760
    %1396 = vmatpush1.msra.mxu0 %v1395
    %1397 = vmatprep.subr.mxu0 0.0
    %v1398 = vand.u32 %v1029, 4294901760
    %v1399 = vsub.f32 %v1029, %v1398
    %v1400 = vand.u32 %v1399, 4294901760
    %1401 = vmatpush1.msra.mxu0 %v1400
    %1402 = vmatprep.subr.mxu0 0.0
    %v1403 = vand.u32 %v1028, 4294901760
    %v1404 = vsub.f32 %v1028, %v1403
    %v1405 = vand.u32 %v1404, 4294901760
    %1406 = vmatpush1.msra.mxu0 %v1405
    %1407 = vmatprep.subr.mxu0 0.0
    %v1408 = vand.u32 %v1027, 4294901760
    %v1409 = vsub.f32 %v1027, %v1408
    %v1410 = vand.u32 %v1409, 4294901760
    %1411 = vmatpush1.msra.mxu0 %v1410
    %1412 = vmatprep.subr.mxu0 0.0
    %1413 = vmatpush2.msra.mxu0 0.0
    %1414 = vmatprep.subr.mxu0 0.0
    %1415 = vmatpush2.msra.mxu0 0.0
    %1416 = vmatprep.subr.mxu0 0.0
    %1417 = vmatpush2.msra.mxu0 0.0
    %1418 = vmatprep.subr.mxu0 0.0
    %1419 = vmatpush2.msra.mxu0 0.0
    %1420 = vmatprep.subr.mxu0 0.0
    %1421 = vmatpush2.msra.mxu0 0.0
    %1422 = vmatprep.subr.mxu0 0.0
    %1423 = vmatpush2.msra.mxu0 0.0
    %1424 = vmatprep.subr.mxu0 0.0
    %1425 = vmatpush2.msra.mxu0 0.0
    %1426 = vmatprep.subr.mxu0 0.0
    %1427 = vmatpush2.msra.mxu0 0.0
    %1428 = vmatprep.subr.mxu0 0.0
    %1429 = vmatpush2.msra.mxu0 0.0
    %1430 = vmatprep.subr.mxu0 0.0
    %1431 = vmatpush2.msra.mxu0 0.0
    %1432 = vmatprep.subr.mxu0 0.0
    %1433 = vmatpush2.msra.mxu0 0.0
    %1434 = vmatprep.subr.mxu0 0.0
    %1435 = vmatpush2.msra.mxu0 0.0
    %1436 = vmatprep.subr.mxu0 0.0
    %1437 = vmatpush2.msra.mxu0 0.0
    %1438 = vmatprep.subr.mxu0 0.0
    %1439 = vmatpush2.msra.mxu0 0.0
    %1440 = vmatprep.subr.mxu0 0.0
    %1441 = vmatpush2.msra.mxu0 0.0
    %1442 = vmatprep.subr.mxu0 0.0
    %1443 = vmatpush2.msra.mxu0 0.0
    %1444 = vmatprep.mubr.f32.mxu0 0.0
    %v1445 = vand.u32 %v1039, 4294901760
    %1446 = vmatmul.mubr.f32.gmra.mxu0 %v1445
    %v1447 = vpop.f32.mrf.mxu0
    %v1448 = vadd.f32 %v1365, %v1447
    %v1449 = vpop.f32.mrf.mxu0
    %1450 = vdwg.mxu0
    %1451 = vmatprep.subr.mxu0 0.0
    %1452 = vmatpush1.msra.mxu0 0.0
    %1453 = vmatprep.subr.mxu0 0.0
    %1454 = vmatpush1.msra.mxu0 0.0
    %1455 = vmatprep.subr.mxu0 0.0
    %1456 = vmatpush1.msra.mxu0 0.0
    %1457 = vmatprep.subr.mxu0 0.0
    %1458 = vmatpush1.msra.mxu0 0.0
    %1459 = vmatprep.subr.mxu0 0.0
    %1460 = vmatpush1.msra.mxu0 0.0
    %1461 = vmatprep.subr.mxu0 0.0
    %1462 = vmatpush1.msra.mxu0 0.0
    %1463 = vmatprep.subr.mxu0 0.0
    %1464 = vmatpush1.msra.mxu0 0.0
    %1465 = vmatprep.subr.mxu0 0.0
    %1466 = vmatpush1.msra.mxu0 0.0
    %1467 = vmatprep.subr.mxu0 0.0
    %1468 = vmatpush1.msra.mxu0 0.0
    %1469 = vmatprep.subr.mxu0 0.0
    %1470 = vmatpush1.msra.mxu0 0.0
    %1471 = vmatprep.subr.mxu0 0.0
    %1472 = vmatpush1.msra.mxu0 0.0
    %1473 = vmatprep.subr.mxu0 0.0
    %1474 = vmatpush1.msra.mxu0 0.0
    %1475 = vmatprep.subr.mxu0 0.0
    %v1476 = vand.u32 %v1030, 4294901760
    %1477 = vmatpush1.msra.mxu0 %v1476
    %1478 = vmatprep.subr.mxu0 0.0
    %v1479 = vand.u32 %v1029, 4294901760
    %1480 = vmatpush1.msra.mxu0 %v1479
    %1481 = vmatprep.subr.mxu0 0.0
    %v1482 = vand.u32 %v1028, 4294901760
    %1483 = vmatpush1.msra.mxu0 %v1482
    %1484 = vmatprep.subr.mxu0 0.0
    %v1485 = vand.u32 %v1027, 4294901760
    %1486 = vmatpush1.msra.mxu0 %v1485
    %1487 = vmatprep.subr.mxu0 0.0
    %1488 = vmatpush2.msra.mxu0 0.0
    %1489 = vmatprep.subr.mxu0 0.0
    %1490 = vmatpush2.msra.mxu0 0.0
    %1491 = vmatprep.subr.mxu0 0.0
    %1492 = vmatpush2.msra.mxu0 0.0
    %1493 = vmatprep.subr.mxu0 0.0
    %1494 = vmatpush2.msra.mxu0 0.0
    %1495 = vmatprep.subr.mxu0 0.0
    %1496 = vmatpush2.msra.mxu0 0.0
    %1497 = vmatprep.subr.mxu0 0.0
    %1498 = vmatpush2.msra.mxu0 0.0
    %1499 = vmatprep.subr.mxu0 0.0
    %1500 = vmatpush2.msra.mxu0 0.0
    %1501 = vmatprep.subr.mxu0 0.0
    %1502 = vmatpush2.msra.mxu0 0.0
    %1503 = vmatprep.subr.mxu0 0.0
    %1504 = vmatpush2.msra.mxu0 0.0
    %1505 = vmatprep.subr.mxu0 0.0
    %1506 = vmatpush2.msra.mxu0 0.0
    %1507 = vmatprep.subr.mxu0 0.0
    %1508 = vmatpush2.msra.mxu0 0.0
    %1509 = vmatprep.subr.mxu0 0.0
    %1510 = vmatpush2.msra.mxu0 0.0
    %1511 = vmatprep.subr.mxu0 0.0
    %1512 = vmatpush2.msra.mxu0 0.0
    %1513 = vmatprep.subr.mxu0 0.0
    %1514 = vmatpush2.msra.mxu0 0.0
    %1515 = vmatprep.subr.mxu0 0.0
    %1516 = vmatpush2.msra.mxu0 0.0
    %1517 = vmatprep.subr.mxu0 0.0
    %1518 = vmatpush2.msra.mxu0 0.0
    %1519 = vmatprep.mubr.f32.mxu0 0.0
    %v1520 = vand.u32 %v1039, 4294901760
    %1521 = vmatmul.mubr.f32.gmra.mxu0 %v1520
    %v1522 = vpop.f32.mrf.mxu0
    %v1523 = vadd.f32 %v1448, %v1522
    %v1524 = vpop.f32.mrf.mxu0
    %1525 = vdwg.mxu0
    %vm1526 = vcmask 31744
    %1527 = vst.msk [vmem:[%s7] sm:$0xff] %vm1526, %v1523
    // Predicated region
    $region38: #{policy_network_forward.1} parent=1 // pred_check
      _
    $region39: #{policy_network_forward.1} parent=1 // pred_check_branch
      %1529 = sbr.rel (0) target = $region41
    $region40: #{policy_network_forward.1} parent=1 // pred_region
      _
    $region41: #{policy_network_forward.1} parent=1 // pred_fallthru
      _
    // Predicated region
    $region42: #{policy_network_forward.1} parent=1 // pred_check
      _
    $region43: #{policy_network_forward.1} parent=1 // pred_check_branch
      %1531 = sbr.rel (0) target = $region45
    $region44: #{policy_network_forward.1} parent=1 // pred_region
      _
    $region45: #{policy_network_forward.1} parent=1 // pred_fallthru
      _
    %1532 = vsyncpa [#allocation3], 1
    %1533 = vsyncpa [#allocation5], 1

</llo_original>
